<compile_context>
chip_gen: v7x
topology: tpu7x:2x2x1
jax: 0.10.0
libtpu: 0.0.40
codegen_flags: <defaults>
</compile_context>

<pallas_src>
import jax
import jax.numpy as jnp
from jax import lax
from jax.experimental import pallas as pl
from jax.experimental.pallas import tpu as pltpu

EPS = 1e-5

# Matmul input dtype.  Set to jnp.bfloat16 to engage the native bf16 MXU path
# on v6e/v7x (accumulation and all BN math stay f32; expect ~1e-2 abs drift).
# Default f32 preserves 1e-3 fidelity to the f32 PyTorch-style reference.
MM_DTYPE = jnp.float32

# Per-step blocks are only a few hundred KB; 32 MiB fits every generation
# (incl. v7x's 64 MiB physical VMEM) with ample double-buffering headroom.
VMEM_LIMIT = 32 * 1024 * 1024


# ---------------------------------------------------------------------------
# Kernels: one image per grid step, lane-dense (H, W*C) tiles.
# ---------------------------------------------------------------------------

def _mm(a, w):
    return jnp.dot(a.astype(MM_DTYPE), w.astype(MM_DTYPE),
                   preferred_element_type=jnp.float32)


def _store_conv_and_stats(y, y_ref, ps_ref):
    y_ref[0] = y
    # one-pass BN statistics: per-lane sum and sum-of-squares for this image
    ps_ref[0] = jnp.concatenate(
        [jnp.sum(y, axis=0, keepdims=True),
         jnp.sum(y * y, axis=0, keepdims=True)], axis=0)


def conv1x1_stats_kernel(x_ref, w_ref, y_ref, ps_ref):
    """y = x @ kron(I_W, w1); emit per-image (sum, sum^2)."""
    _store_conv_and_stats(_mm(x_ref[0], w_ref[...]), y_ref, ps_ref)


def bn_relu_conv1x1_stats_kernel(x_ref, scale_ref, shift_ref, w_ref,
                                 y_ref, ps_ref):
    """y = relu(x*scale + shift) @ kron(I_W, w3); emit per-image stats."""
    a = jnp.maximum(x_ref[0] * scale_ref[...] + shift_ref[...], 0.0)
    _store_conv_and_stats(_mm(a, w_ref[...]), y_ref, ps_ref)


def bn_relu_conv3x3_stats_kernel(x_ref, scale_ref, shift_ref, w_ref,
                                 y_ref, ps_ref):
    """3x3 conv as 3 banded K=128 matmuls; W-taps live inside the band
    matrices, H-taps are a +/-1 row shift with zeroed edge rows."""
    a = jnp.maximum(x_ref[0] * scale_ref[...] + shift_ref[...], 0.0)  # (H, W*C)
    zero_row = jnp.zeros_like(a[:1])
    up = jnp.concatenate([zero_row, a[:-1]], axis=0)   # row h sees a[h-1]
    dn = jnp.concatenate([a[1:], zero_row], axis=0)    # row h sees a[h+1]
    y = _mm(a, w_ref[1]) + _mm(up, w_ref[0]) + _mm(dn, w_ref[2])
    _store_conv_and_stats(y, y_ref, ps_ref)


def bn_add_relu_kernel(y_ref, scale_ref, shift_ref, id_ref, o_ref):
    o_ref[0] = jnp.maximum(
        y_ref[0] * scale_ref[...] + shift_ref[...] + id_ref[0], 0.0)


# ---------------------------------------------------------------------------
# Wrapper helpers
# ---------------------------------------------------------------------------

def _img_spec(h, l):
    return pl.BlockSpec((1, h, l), lambda n: (n, 0, 0))


def _resident_spec(shape):
    # full-extent block + constant index_map => DMA'd once, resident over grid
    return pl.BlockSpec(shape, lambda n: (0,) * len(shape))


def _conv_call(kernel, inputs, in_specs, n, h, l_out, flops):
    bytes_accessed = 4 * (sum(int(a.size) for a in inputs)
                          + n * (h + 2) * l_out)
    return pl.pallas_call(
        kernel,
        grid=(n,),
        in_specs=in_specs,
        out_specs=[_img_spec(h, l_out),
                   pl.BlockSpec((1, 2, l_out), lambda i: (i, 0, 0))],
        out_shape=[jax.ShapeDtypeStruct((n, h, l_out), jnp.float32),
                   jax.ShapeDtypeStruct((n, 2, l_out), jnp.float32)],
        compiler_params=pltpu.CompilerParams(
            dimension_semantics=("parallel",),
            vmem_limit_bytes=VMEM_LIMIT),
        cost_estimate=pl.CostEstimate(flops=flops, transcendentals=0,
                                      bytes_accessed=bytes_accessed),
    )(*inputs)


def _pack_weights(w1, w2, w3, w):
    """Fold the image width W into the weights so every conv is a single
    lane-dense matmul on (H, W*C) activations."""
    eye = jnp.eye(w, dtype=jnp.float32)
    w1b = jnp.kron(eye, w1)                                # (W*Cin , W*Cmid)
    w3b = jnp.kron(eye, w3)                                # (W*Cmid, W*Cout)
    w2b = jnp.stack([                                      # (3, W*Cmid, W*Cmid)
        sum(jnp.kron(jnp.eye(w, k=1 - kw, dtype=jnp.float32), w2[kh, kw])
            for kw in range(3))
        for kh in range(3)])
    return w1b, w2b, w3b


def _fold_bn(partials, c, w, gamma, beta, count):
    """Global one-pass BN stats from per-image partial sums, folded with
    gamma/beta into a per-lane affine (scale, shift), tiled over W."""
    tot = partials.sum(axis=0).reshape(2, w, c).sum(axis=1)   # (2, C)
    mean = tot[0] / count
    var = tot[1] / count - mean * mean                        # biased, one-pass
    scale = gamma.reshape(-1) * lax.rsqrt(var + EPS)
    shift = beta.reshape(-1) - mean * scale
    return jnp.tile(scale, w)[None, :], jnp.tile(shift, w)[None, :]


@jax.jit
def bottleneck_forward(x_nchw, params):
    """x_nchw: (N, Cin, H, W) float32. Returns (N, Cout, H, W)."""
    w1, g1, b1, w2, g2, b2, w3, g3, b3 = params
    n, cin, h, w = x_nchw.shape
    cmid = w1.shape[1]
    cout = w3.shape[1]
    assert cout == cin, "residual add requires in_ch == out_ch * expansion"
    # lane-dense flattened layout requirements (hold for the demo shapes)
    assert (w * cmid) % 128 == 0 and (w * cin) % 128 == 0 and h % 8 == 0

    lin, lmid, lout = w * cin, w * cmid, w * cout
    count = n * h * w

    # Single layout change in / out (an end-to-end NHWC model drops these).
    x_flat = jnp.transpose(x_nchw, (0, 2, 3, 1)).reshape(n, h, lin)

    w1b, w2b, w3b = _pack_weights(w1, w2, w3, w)

    # --- conv1 (1x1) + stats ------------------------------------------------
    y1, ps1 = _conv_call(conv1x1_stats_kernel, (x_flat, w1b),
                         [_img_spec(h, lin), _resident_spec(w1b.shape)],
                         n, h, lmid, flops=2 * n * h * lin * lmid)
    s1, t1 = _fold_bn(ps1, cmid, w, g1, b1, count)

    # --- bn1 + relu + conv2 (3x3) + stats ------------------------------------
    y2, ps2 = _conv_call(
        bn_relu_conv3x3_stats_kernel, (y1, s1, t1, w2b),
        [_img_spec(h, lmid), _resident_spec(s1.shape),
         _resident_spec(t1.shape), _resident_spec(w2b.shape)],
        n, h, lmid, flops=2 * 3 * n * h * lmid * lmid)
    s2, t2 = _fold_bn(ps2, cmid, w, g2, b2, count)

    # --- bn2 + relu + conv3 (1x1, expansion) + stats --------------------------
    y3, ps3 = _conv_call(
        bn_relu_conv1x1_stats_kernel, (y2, s2, t2, w3b),
        [_img_spec(h, lmid), _resident_spec(s2.shape),
         _resident_spec(t2.shape), _resident_spec(w3b.shape)],
        n, h, lout, flops=2 * n * h * lmid * lout)
    s3, t3 = _fold_bn(ps3, cout, w, g3, b3, count)

    # --- bn3 + identity + relu ------------------------------------------------
    out_flat = pl.pallas_call(
        bn_add_relu_kernel,
        grid=(n,),
        in_specs=[_img_spec(h, lout), _resident_spec(s3.shape),
                  _resident_spec(t3.shape), _img_spec(h, lout)],
        out_specs=_img_spec(h, lout),
        out_shape=jax.ShapeDtypeStruct((n, h, lout), jnp.float32),
        compiler_params=pltpu.CompilerParams(
            dimension_semantics=("parallel",),
            vmem_limit_bytes=VMEM_LIMIT),
        cost_estimate=pl.CostEstimate(
            flops=3 * n * h * lout, transcendentals=0,
            bytes_accessed=4 * 3 * n * h * lout),
    )(y3, s3, t3, x_flat)

    out = out_flat.reshape(n, h, w, cout)
    return jnp.transpose(out, (0, 3, 1, 2))


# ---------------------------------------------------------------------------
# Pure-JAX reference (lax.conv) with identical training-mode BN math.
# ---------------------------------------------------------------------------

def bottleneck_reference(x_nchw, params):
    w1, g1, b1, w2, g2, b2, w3, g3, b3 = params
    x = jnp.transpose(x_nchw, (0, 2, 3, 1))
    dn = ("NHWC", "HWIO", "NHWC")

    def bn(y, g, b):
        m = y.mean((0, 1, 2), keepdims=True)
        v = ((y - m) ** 2).mean((0, 1, 2), keepdims=True)
        return (y - m) / jnp.sqrt(v + EPS) * g.reshape(1, 1, 1, -1) \
            + b.reshape(1, 1, 1, -1)

    y = lax.conv_general_dilated(x, w1.reshape(1, 1, *w1.shape), (1, 1),
                                 "VALID", dimension_numbers=dn)
    y = jax.nn.relu(bn(y, g1, b1))
    y = lax.conv_general_dilated(y, w2, (1, 1), ((1, 1), (1, 1)),
                                 dimension_numbers=dn)
    y = jax.nn.relu(bn(y, g2, b2))
    y = lax.conv_general_dilated(y, w3.reshape(1, 1, *w3.shape), (1, 1),
                                 "VALID", dimension_numbers=dn)
    y = jax.nn.relu(bn(y, g3, b3) + x)
    return jnp.transpose(y, (0, 3, 1, 2))


def init_params(key, in_ch, out_ch):
    """Deterministic synthetic parameters (conv weights in HWIO / IO layout)."""
    exp = 4
    cout = out_ch * exp
    ks = jax.random.split(key, 9)
    w1 = 0.1 * jax.random.normal(ks[0], (in_ch, out_ch), jnp.float32)
    w2 = 0.1 * jax.random.normal(ks[1], (3, 3, out_ch, out_ch), jnp.float32)
    w3 = 0.1 * jax.random.normal(ks[2], (out_ch, cout), jnp.float32)
    g1 = 1.0 + 0.1 * jax.random.normal(ks[3], (1, out_ch), jnp.float32)
    b1 = 0.1 * jax.random.normal(ks[4], (1, out_ch), jnp.float32)
    g2 = 1.0 + 0.1 * jax.random.normal(ks[5], (1, out_ch), jnp.float32)
    b2 = 0.1 * jax.random.normal(ks[6], (1, out_ch), jnp.float32)
    g3 = 1.0 + 0.1 * jax.random.normal(ks[7], (1, cout), jnp.float32)
    b3 = 0.1 * jax.random.normal(ks[8], (1, cout), jnp.float32)
    return (w1, g1, b1, w2, g2, b2, w3, g3, b3)


if __name__ == "__main__":
    key = jax.random.PRNGKey(0)
    k_x, k_p = jax.random.split(key)

    # Bottleneck(in_ch=32, out_ch=8): residual requires in_ch == out_ch * 4.
    N, IN_CH, OUT_CH, H, W = 2, 32, 8, 16, 16
    x = jax.random.normal(k_x, (N, IN_CH, H, W), jnp.float32)
    params = init_params(k_p, IN_CH, OUT_CH)

    out = bottleneck_forward(x, params)
    out = jax.block_until_ready(out)

    ref = jax.block_until_ready(bottleneck_reference(x, params))
    assert out.shape == (N, IN_CH, H, W)
    assert jnp.allclose(out, ref, atol=1e-3, rtol=1e-3), (
        f"max abs err {jnp.max(jnp.abs(out - ref)):.3e}")

    print("KERNEL_OK")
</pallas_src>

<mosaic_0001>
module attributes {stable_mosaic.version = 11 : i64} {
  func.func @conv1x1_stats_kernel(%arg0: i32, %arg1: memref<1x16x512xf32, #tpu.memory_space<vmem>>, %arg2: memref<512x128xf32, #tpu.memory_space<vmem>>, %arg3: memref<1x16x128xf32, #tpu.memory_space<vmem>>, %arg4: memref<1x2x128xf32, #tpu.memory_space<vmem>>) attributes {dimension_semantics = [#tpu.dimension_semantics<parallel>], iteration_bounds = array<i64: 2>, scalar_prefetch = 0 : i64, scratch_operands = 0 : i64, tpu.core_type = #tpu.core_type<tc>, window_params = [{transform_indices = @transform_0, window_bounds = array<i64: 1, 16, 512>}, {pipeline_mode = #tpu.pipeline_mode<synchronous>, transform_indices = @transform_1, window_bounds = array<i64: 512, 128>}, {transform_indices = @transform_2, window_bounds = array<i64: 1, 16, 128>}, {transform_indices = @transform_3, window_bounds = array<i64: 1, 2, 128>}]} {
    %c0 = arith.constant 0 : index
    %c0_0 = arith.constant 0 : index
    %c0_1 = arith.constant 0 : index
    %0 = vector.load %arg1[%c0, %c0_0, %c0_1] : memref<1x16x512xf32, #tpu.memory_space<vmem>>, vector<1x16x512xf32>
    %1 = vector.shape_cast %0 : vector<1x16x512xf32> to vector<16x512xf32>
    %c0_2 = arith.constant 0 : index
    %c0_3 = arith.constant 0 : index
    %2 = vector.load %arg2[%c0_2, %c0_3] : memref<512x128xf32, #tpu.memory_space<vmem>>, vector<512x128xf32>
    %cst = arith.constant dense<0.000000e+00> : vector<16x128xf32>
    %3 = tpu.matmul %1, %2, %cst {dimension_numbers = #tpu.dot_dimension_numbers<[1], [0], [0], [1], [0, 0, 1, 1], [], []>} : vector<16x512xf32>, vector<512x128xf32>, vector<16x128xf32> -> vector<16x128xf32>
    %c0_4 = arith.constant 0 : index
    %c0_5 = arith.constant 0 : index
    %c0_6 = arith.constant 0 : index
    %4 = vector.load %arg3[%c0_4, %c0_5, %c0_6] : memref<1x16x128xf32, #tpu.memory_space<vmem>>, vector<1x16x128xf32>
    %5 = vector.shape_cast %4 : vector<1x16x128xf32> to vector<16x128xf32>
    %6 = vector.shape_cast %3 : vector<16x128xf32> to vector<1x16x128xf32>
    tpu.vector_store %arg3[%c0_4, %c0_5, %c0_6], %6 {strides = array<i32>} : memref<1x16x128xf32, #tpu.memory_space<vmem>>, vector<1x16x128xf32>,
    %cst_7 = arith.constant dense<0.000000e+00> : vector<128xf32>
    %7 = vector.multi_reduction <add>, %3, %cst_7 [0] : vector<16x128xf32> to vector<128xf32>
    %8 = vector.shape_cast %7 : vector<128xf32> to vector<1x128xf32>
    %9 = arith.mulf %3, %3 : vector<16x128xf32>
    %cst_8 = arith.constant dense<0.000000e+00> : vector<128xf32>
    %10 = vector.multi_reduction <add>, %9, %cst_8 [0] : vector<16x128xf32> to vector<128xf32>
    %11 = vector.shape_cast %10 : vector<128xf32> to vector<1x128xf32>
    %12 = tpu.concatenate %8, %11 in 0 : vector<1x128xf32>, vector<1x128xf32> -> vector<2x128xf32>
    %c0_9 = arith.constant 0 : index
    %c0_10 = arith.constant 0 : index
    %c0_11 = arith.constant 0 : index
    %13 = vector.load %arg4[%c0_9, %c0_10, %c0_11] : memref<1x2x128xf32, #tpu.memory_space<vmem>>, vector<1x2x128xf32>
    %14 = vector.shape_cast %13 : vector<1x2x128xf32> to vector<2x128xf32>
    %15 = vector.shape_cast %12 : vector<2x128xf32> to vector<1x2x128xf32>
    tpu.vector_store %arg4[%c0_9, %c0_10, %c0_11], %15 {strides = array<i32>} : memref<1x2x128xf32, #tpu.memory_space<vmem>>, vector<1x2x128xf32>,
    return
  }
  func.func @transform_0(%arg0: i32) -> (i32, i32, i32) {
    %c0_i32 = arith.constant 0 : i32
    %c0_i32_0 = arith.constant 0 : i32
    %c0_i32_1 = arith.constant 0 : i32
    return %arg0, %c0_i32, %c0_i32_0 : i32, i32, i32
  }
  func.func @transform_1(%arg0: i32) -> (i32, i32) {
    %c0_i32 = arith.constant 0 : i32
    %c0_i32_0 = arith.constant 0 : i32
    %c0_i32_1 = arith.constant 0 : i32
    return %c0_i32, %c0_i32_0 : i32, i32
  }
  func.func @transform_2(%arg0: i32) -> (i32, i32, i32) {
    %c0_i32 = arith.constant 0 : i32
    %c0_i32_0 = arith.constant 0 : i32
    %c0_i32_1 = arith.constant 0 : i32
    return %arg0, %c0_i32, %c0_i32_0 : i32, i32, i32
  }
  func.func @transform_3(%arg0: i32) -> (i32, i32, i32) {
    %c0_i32 = arith.constant 0 : i32
    %c0_i32_0 = arith.constant 0 : i32
    %c0_i32_1 = arith.constant 0 : i32
    return %arg0, %c0_i32, %c0_i32_0 : i32, i32, i32
  }
}

module attributes {stable_mosaic.version = 11 : i64} {
  func.func @bn_relu_conv3x3_stats_kernel(%arg0: i32, %arg1: memref<1x16x128xf32, #tpu.memory_space<vmem>>, %arg2: memref<1x128xf32, #tpu.memory_space<vmem>>, %arg3: memref<1x128xf32, #tpu.memory_space<vmem>>, %arg4: memref<3x128x128xf32, #tpu.memory_space<vmem>>, %arg5: memref<1x16x128xf32, #tpu.memory_space<vmem>>, %arg6: memref<1x2x128xf32, #tpu.memory_space<vmem>>) attributes {dimension_semantics = [#tpu.dimension_semantics<parallel>], iteration_bounds = array<i64: 2>, scalar_prefetch = 0 : i64, scratch_operands = 0 : i64, tpu.core_type = #tpu.core_type<tc>, window_params = [{transform_indices = @transform_0, window_bounds = array<i64: 1, 16, 128>}, {pipeline_mode = #tpu.pipeline_mode<synchronous>, transform_indices = @transform_1, window_bounds = array<i64: 1, 128>}, {pipeline_mode = #tpu.pipeline_mode<synchronous>, transform_indices = @transform_2, window_bounds = array<i64: 1, 128>}, {pipeline_mode = #tpu.pipeline_mode<synchronous>, transform_indices = @transform_3, window_bounds = array<i64: 3, 128, 128>}, {transform_indices = @transform_4, window_bounds = array<i64: 1, 16, 128>}, {transform_indices = @transform_5, window_bounds = array<i64: 1, 2, 128>}]} {
    %c0 = arith.constant 0 : index
    %c0_0 = arith.constant 0 : index
    %c0_1 = arith.constant 0 : index
    %0 = vector.load %arg1[%c0, %c0_0, %c0_1] : memref<1x16x128xf32, #tpu.memory_space<vmem>>, vector<1x16x128xf32>
    %1 = vector.shape_cast %0 : vector<1x16x128xf32> to vector<16x128xf32>
    %c0_2 = arith.constant 0 : index
    %c0_3 = arith.constant 0 : index
    %2 = vector.load %arg2[%c0_2, %c0_3] : memref<1x128xf32, #tpu.memory_space<vmem>>, vector<1x128xf32>
    %3 = vector.broadcast %2 : vector<1x128xf32> to vector<16x128xf32>
    %4 = arith.mulf %1, %3 : vector<16x128xf32>
    %c0_4 = arith.constant 0 : index
    %c0_5 = arith.constant 0 : index
    %5 = vector.load %arg3[%c0_4, %c0_5] : memref<1x128xf32, #tpu.memory_space<vmem>>, vector<1x128xf32>
    %6 = vector.broadcast %5 : vector<1x128xf32> to vector<16x128xf32>
    %7 = arith.addf %4, %6 : vector<16x128xf32>
    %cst = arith.constant 0.000000e+00 : f32
    %8 = vector.broadcast %cst : f32 to vector<16x128xf32>
    %9 = arith.maximumf %7, %8 : vector<16x128xf32>
    %cst_6 = arith.constant 0.000000e+00 : f32
    %10 = vector.broadcast %cst_6 : f32 to vector<1x128xf32>
    %11 = vector.extract_strided_slice %9 {offsets = [0, 0], sizes = [15, 128], strides = [1, 1]} : vector<16x128xf32> to vector<15x128xf32>
    %12 = tpu.concatenate %10, %11 in 0 : vector<1x128xf32>, vector<15x128xf32> -> vector<16x128xf32>
    %13 = vector.extract_strided_slice %9 {offsets = [1, 0], sizes = [15, 128], strides = [1, 1]} : vector<16x128xf32> to vector<15x128xf32>
    %14 = tpu.concatenate %13, %10 in 0 : vector<15x128xf32>, vector<1x128xf32> -> vector<16x128xf32>
    %c1 = arith.constant 1 : index
    %c0_7 = arith.constant 0 : index
    %c0_8 = arith.constant 0 : index
    %15 = vector.load %arg4[%c1, %c0_7, %c0_8] : memref<3x128x128xf32, #tpu.memory_space<vmem>>, vector<1x128x128xf32>
    %16 = vector.shape_cast %15 : vector<1x128x128xf32> to vector<128x128xf32>
    %cst_9 = arith.constant dense<0.000000e+00> : vector<16x128xf32>
    %17 = tpu.matmul %9, %16, %cst_9 {dimension_numbers = #tpu.dot_dimension_numbers<[1], [0], [0], [1], [0, 0, 1, 1], [], []>} : vector<16x128xf32>, vector<128x128xf32>, vector<16x128xf32> -> vector<16x128xf32>
    %c0_10 = arith.constant 0 : index
    %c0_11 = arith.constant 0 : index
    %c0_12 = arith.constant 0 : index
    %18 = vector.load %arg4[%c0_10, %c0_11, %c0_12] : memref<3x128x128xf32, #tpu.memory_space<vmem>>, vector<1x128x128xf32>
    %19 = vector.shape_cast %18 : vector<1x128x128xf32> to vector<128x128xf32>
    %cst_13 = arith.constant dense<0.000000e+00> : vector<16x128xf32>
    %20 = tpu.matmul %12, %19, %cst_13 {dimension_numbers = #tpu.dot_dimension_numbers<[1], [0], [0], [1], [0, 0, 1, 1], [], []>} : vector<16x128xf32>, vector<128x128xf32>, vector<16x128xf32> -> vector<16x128xf32>
    %21 = arith.addf %17, %20 : vector<16x128xf32>
    %c2 = arith.constant 2 : index
    %c0_14 = arith.constant 0 : index
    %c0_15 = arith.constant 0 : index
    %22 = vector.load %arg4[%c2, %c0_14, %c0_15] : memref<3x128x128xf32, #tpu.memory_space<vmem>>, vector<1x128x128xf32>
    %23 = vector.shape_cast %22 : vector<1x128x128xf32> to vector<128x128xf32>
    %cst_16 = arith.constant dense<0.000000e+00> : vector<16x128xf32>
    %24 = tpu.matmul %14, %23, %cst_16 {dimension_numbers = #tpu.dot_dimension_numbers<[1], [0], [0], [1], [0, 0, 1, 1], [], []>} : vector<16x128xf32>, vector<128x128xf32>, vector<16x128xf32> -> vector<16x128xf32>
    %25 = arith.addf %21, %24 : vector<16x128xf32>
    %c0_17 = arith.constant 0 : index
    %c0_18 = arith.constant 0 : index
    %c0_19 = arith.constant 0 : index
    %26 = vector.load %arg5[%c0_17, %c0_18, %c0_19] : memref<1x16x128xf32, #tpu.memory_space<vmem>>, vector<1x16x128xf32>
    %27 = vector.shape_cast %26 : vector<1x16x128xf32> to vector<16x128xf32>
    %28 = vector.shape_cast %25 : vector<16x128xf32> to vector<1x16x128xf32>
    tpu.vector_store %arg5[%c0_17, %c0_18, %c0_19], %28 {strides = array<i32>} : memref<1x16x128xf32, #tpu.memory_space<vmem>>, vector<1x16x128xf32>,
    %cst_20 = arith.constant dense<0.000000e+00> : vector<128xf32>
    %29 = vector.multi_reduction <add>, %25, %cst_20 [0] : vector<16x128xf32> to vector<128xf32>
    %30 = vector.shape_cast %29 : vector<128xf32> to vector<1x128xf32>
    %31 = arith.mulf %25, %25 : vector<16x128xf32>
    %cst_21 = arith.constant dense<0.000000e+00> : vector<128xf32>
    %32 = vector.multi_reduction <add>, %31, %cst_21 [0] : vector<16x128xf32> to vector<128xf32>
    %33 = vector.shape_cast %32 : vector<128xf32> to vector<1x128xf32>
    %34 = tpu.concatenate %30, %33 in 0 : vector<1x128xf32>, vector<1x128xf32> -> vector<2x128xf32>
    %c0_22 = arith.constant 0 : index
    %c0_23 = arith.constant 0 : index
    %c0_24 = arith.constant 0 : index
    %35 = vector.load %arg6[%c0_22, %c0_23, %c0_24] : memref<1x2x128xf32, #tpu.memory_space<vmem>>, vector<1x2x128xf32>
    %36 = vector.shape_cast %35 : vector<1x2x128xf32> to vector<2x128xf32>
    %37 = vector.shape_cast %34 : vector<2x128xf32> to vector<1x2x128xf32>
    tpu.vector_store %arg6[%c0_22, %c0_23, %c0_24], %37 {strides = array<i32>} : memref<1x2x128xf32, #tpu.memory_space<vmem>>, vector<1x2x128xf32>,
    return
  }
  func.func @transform_0(%arg0: i32) -> (i32, i32, i32) {
    %c0_i32 = arith.constant 0 : i32
    %c0_i32_0 = arith.constant 0 : i32
    %c0_i32_1 = arith.constant 0 : i32
    return %arg0, %c0_i32, %c0_i32_0 : i32, i32, i32
  }
  func.func @transform_1(%arg0: i32) -> (i32, i32) {
    %c0_i32 = arith.constant 0 : i32
    %c0_i32_0 = arith.constant 0 : i32
    %c0_i32_1 = arith.constant 0 : i32
    return %c0_i32, %c0_i32_0 : i32, i32
  }
  func.func @transform_2(%arg0: i32) -> (i32, i32) {
    %c0_i32 = arith.constant 0 : i32
    %c0_i32_0 = arith.constant 0 : i32
    %c0_i32_1 = arith.constant 0 : i32
    return %c0_i32, %c0_i32_0 : i32, i32
  }
  func.func @transform_3(%arg0: i32) -> (i32, i32, i32) {
    %c0_i32 = arith.constant 0 : i32
    %c0_i32_0 = arith.constant 0 : i32
    %c0_i32_1 = arith.constant 0 : i32
    %c0_i32_2 = arith.constant 0 : i32
    return %c0_i32, %c0_i32_0, %c0_i32_1 : i32, i32, i32
  }
  func.func @transform_4(%arg0: i32) -> (i32, i32, i32) {
    %c0_i32 = arith.constant 0 : i32
    %c0_i32_0 = arith.constant 0 : i32
    %c0_i32_1 = arith.constant 0 : i32
    return %arg0, %c0_i32, %c0_i32_0 : i32, i32, i32
  }
  func.func @transform_5(%arg0: i32) -> (i32, i32, i32) {
    %c0_i32 = arith.constant 0 : i32
    %c0_i32_0 = arith.constant 0 : i32
    %c0_i32_1 = arith.constant 0 : i32
    return %arg0, %c0_i32, %c0_i32_0 : i32, i32, i32
  }
}

module attributes {stable_mosaic.version = 11 : i64} {
  func.func @bn_relu_conv1x1_stats_kernel(%arg0: i32, %arg1: memref<1x16x128xf32, #tpu.memory_space<vmem>>, %arg2: memref<1x128xf32, #tpu.memory_space<vmem>>, %arg3: memref<1x128xf32, #tpu.memory_space<vmem>>, %arg4: memref<128x512xf32, #tpu.memory_space<vmem>>, %arg5: memref<1x16x512xf32, #tpu.memory_space<vmem>>, %arg6: memref<1x2x512xf32, #tpu.memory_space<vmem>>) attributes {dimension_semantics = [#tpu.dimension_semantics<parallel>], iteration_bounds = array<i64: 2>, scalar_prefetch = 0 : i64, scratch_operands = 0 : i64, tpu.core_type = #tpu.core_type<tc>, window_params = [{transform_indices = @transform_0, window_bounds = array<i64: 1, 16, 128>}, {pipeline_mode = #tpu.pipeline_mode<synchronous>, transform_indices = @transform_1, window_bounds = array<i64: 1, 128>}, {pipeline_mode = #tpu.pipeline_mode<synchronous>, transform_indices = @transform_2, window_bounds = array<i64: 1, 128>}, {pipeline_mode = #tpu.pipeline_mode<synchronous>, transform_indices = @transform_3, window_bounds = array<i64: 128, 512>}, {transform_indices = @transform_4, window_bounds = array<i64: 1, 16, 512>}, {transform_indices = @transform_5, window_bounds = array<i64: 1, 2, 512>}]} {
    %c0 = arith.constant 0 : index
    %c0_0 = arith.constant 0 : index
    %c0_1 = arith.constant 0 : index
    %0 = vector.load %arg1[%c0, %c0_0, %c0_1] : memref<1x16x128xf32, #tpu.memory_space<vmem>>, vector<1x16x128xf32>
    %1 = vector.shape_cast %0 : vector<1x16x128xf32> to vector<16x128xf32>
    %c0_2 = arith.constant 0 : index
    %c0_3 = arith.constant 0 : index
    %2 = vector.load %arg2[%c0_2, %c0_3] : memref<1x128xf32, #tpu.memory_space<vmem>>, vector<1x128xf32>
    %3 = vector.broadcast %2 : vector<1x128xf32> to vector<16x128xf32>
    %4 = arith.mulf %1, %3 : vector<16x128xf32>
    %c0_4 = arith.constant 0 : index
    %c0_5 = arith.constant 0 : index
    %5 = vector.load %arg3[%c0_4, %c0_5] : memref<1x128xf32, #tpu.memory_space<vmem>>, vector<1x128xf32>
    %6 = vector.broadcast %5 : vector<1x128xf32> to vector<16x128xf32>
    %7 = arith.addf %4, %6 : vector<16x128xf32>
    %cst = arith.constant 0.000000e+00 : f32
    %8 = vector.broadcast %cst : f32 to vector<16x128xf32>
    %9 = arith.maximumf %7, %8 : vector<16x128xf32>
    %c0_6 = arith.constant 0 : index
    %c0_7 = arith.constant 0 : index
    %10 = vector.load %arg4[%c0_6, %c0_7] : memref<128x512xf32, #tpu.memory_space<vmem>>, vector<128x512xf32>
    %cst_8 = arith.constant dense<0.000000e+00> : vector<16x512xf32>
    %11 = tpu.matmul %9, %10, %cst_8 {dimension_numbers = #tpu.dot_dimension_numbers<[1], [0], [0], [1], [0, 0, 1, 1], [], []>} : vector<16x128xf32>, vector<128x512xf32>, vector<16x512xf32> -> vector<16x512xf32>
    %c0_9 = arith.constant 0 : index
    %c0_10 = arith.constant 0 : index
    %c0_11 = arith.constant 0 : index
    %12 = vector.load %arg5[%c0_9, %c0_10, %c0_11] : memref<1x16x512xf32, #tpu.memory_space<vmem>>, vector<1x16x512xf32>
    %13 = vector.shape_cast %12 : vector<1x16x512xf32> to vector<16x512xf32>
    %14 = vector.shape_cast %11 : vector<16x512xf32> to vector<1x16x512xf32>
    tpu.vector_store %arg5[%c0_9, %c0_10, %c0_11], %14 {strides = array<i32>} : memref<1x16x512xf32, #tpu.memory_space<vmem>>, vector<1x16x512xf32>,
    %cst_12 = arith.constant dense<0.000000e+00> : vector<512xf32>
    %15 = vector.multi_reduction <add>, %11, %cst_12 [0] : vector<16x512xf32> to vector<512xf32>
    %16 = vector.shape_cast %15 : vector<512xf32> to vector<1x512xf32>
    %17 = arith.mulf %11, %11 : vector<16x512xf32>
    %cst_13 = arith.constant dense<0.000000e+00> : vector<512xf32>
    %18 = vector.multi_reduction <add>, %17, %cst_13 [0] : vector<16x512xf32> to vector<512xf32>
    %19 = vector.shape_cast %18 : vector<512xf32> to vector<1x512xf32>
    %20 = tpu.concatenate %16, %19 in 0 : vector<1x512xf32>, vector<1x512xf32> -> vector<2x512xf32>
    %c0_14 = arith.constant 0 : index
    %c0_15 = arith.constant 0 : index
    %c0_16 = arith.constant 0 : index
    %21 = vector.load %arg6[%c0_14, %c0_15, %c0_16] : memref<1x2x512xf32, #tpu.memory_space<vmem>>, vector<1x2x512xf32>
    %22 = vector.shape_cast %21 : vector<1x2x512xf32> to vector<2x512xf32>
    %23 = vector.shape_cast %20 : vector<2x512xf32> to vector<1x2x512xf32>
    tpu.vector_store %arg6[%c0_14, %c0_15, %c0_16], %23 {strides = array<i32>} : memref<1x2x512xf32, #tpu.memory_space<vmem>>, vector<1x2x512xf32>,
    return
  }
  func.func @transform_0(%arg0: i32) -> (i32, i32, i32) {
    %c0_i32 = arith.constant 0 : i32
    %c0_i32_0 = arith.constant 0 : i32
    %c0_i32_1 = arith.constant 0 : i32
    return %arg0, %c0_i32, %c0_i32_0 : i32, i32, i32
  }
  func.func @transform_1(%arg0: i32) -> (i32, i32) {
    %c0_i32 = arith.constant 0 : i32
    %c0_i32_0 = arith.constant 0 : i32
    %c0_i32_1 = arith.constant 0 : i32
    return %c0_i32, %c0_i32_0 : i32, i32
  }
  func.func @transform_2(%arg0: i32) -> (i32, i32) {
    %c0_i32 = arith.constant 0 : i32
    %c0_i32_0 = arith.constant 0 : i32
    %c0_i32_1 = arith.constant 0 : i32
    return %c0_i32, %c0_i32_0 : i32, i32
  }
  func.func @transform_3(%arg0: i32) -> (i32, i32) {
    %c0_i32 = arith.constant 0 : i32
    %c0_i32_0 = arith.constant 0 : i32
    %c0_i32_1 = arith.constant 0 : i32
    return %c0_i32, %c0_i32_0 : i32, i32
  }
  func.func @transform_4(%arg0: i32) -> (i32, i32, i32) {
    %c0_i32 = arith.constant 0 : i32
    %c0_i32_0 = arith.constant 0 : i32
    %c0_i32_1 = arith.constant 0 : i32
    return %arg0, %c0_i32, %c0_i32_0 : i32, i32, i32
  }
  func.func @transform_5(%arg0: i32) -> (i32, i32, i32) {
    %c0_i32 = arith.constant 0 : i32
    %c0_i32_0 = arith.constant 0 : i32
    %c0_i32_1 = arith.constant 0 : i32
    return %arg0, %c0_i32, %c0_i32_0 : i32, i32, i32
  }
}

module attributes {stable_mosaic.version = 11 : i64} {
  func.func @bn_add_relu_kernel(%arg0: i32, %arg1: memref<1x16x512xf32, #tpu.memory_space<vmem>>, %arg2: memref<1x512xf32, #tpu.memory_space<vmem>>, %arg3: memref<1x512xf32, #tpu.memory_space<vmem>>, %arg4: memref<1x16x512xf32, #tpu.memory_space<vmem>>, %arg5: memref<1x16x512xf32, #tpu.memory_space<vmem>>) attributes {dimension_semantics = [#tpu.dimension_semantics<parallel>], iteration_bounds = array<i64: 2>, scalar_prefetch = 0 : i64, scratch_operands = 0 : i64, tpu.core_type = #tpu.core_type<tc>, window_params = [{transform_indices = @transform_0, window_bounds = array<i64: 1, 16, 512>}, {pipeline_mode = #tpu.pipeline_mode<synchronous>, transform_indices = @transform_1, window_bounds = array<i64: 1, 512>}, {pipeline_mode = #tpu.pipeline_mode<synchronous>, transform_indices = @transform_2, window_bounds = array<i64: 1, 512>}, {transform_indices = @transform_3, window_bounds = array<i64: 1, 16, 512>}, {transform_indices = @transform_4, window_bounds = array<i64: 1, 16, 512>}]} {
    %c0 = arith.constant 0 : index
    %c0_0 = arith.constant 0 : index
    %c0_1 = arith.constant 0 : index
    %0 = vector.load %arg1[%c0, %c0_0, %c0_1] : memref<1x16x512xf32, #tpu.memory_space<vmem>>, vector<1x16x512xf32>
    %1 = vector.shape_cast %0 : vector<1x16x512xf32> to vector<16x512xf32>
    %c0_2 = arith.constant 0 : index
    %c0_3 = arith.constant 0 : index
    %2 = vector.load %arg2[%c0_2, %c0_3] : memref<1x512xf32, #tpu.memory_space<vmem>>, vector<1x512xf32>
    %3 = vector.broadcast %2 : vector<1x512xf32> to vector<16x512xf32>
    %4 = arith.mulf %1, %3 : vector<16x512xf32>
    %c0_4 = arith.constant 0 : index
    %c0_5 = arith.constant 0 : index
    %5 = vector.load %arg3[%c0_4, %c0_5] : memref<1x512xf32, #tpu.memory_space<vmem>>, vector<1x512xf32>
    %6 = vector.broadcast %5 : vector<1x512xf32> to vector<16x512xf32>
    %7 = arith.addf %4, %6 : vector<16x512xf32>
    %c0_6 = arith.constant 0 : index
    %c0_7 = arith.constant 0 : index
    %c0_8 = arith.constant 0 : index
    %8 = vector.load %arg4[%c0_6, %c0_7, %c0_8] : memref<1x16x512xf32, #tpu.memory_space<vmem>>, vector<1x16x512xf32>
    %9 = vector.shape_cast %8 : vector<1x16x512xf32> to vector<16x512xf32>
    %10 = arith.addf %7, %9 : vector<16x512xf32>
    %cst = arith.constant 0.000000e+00 : f32
    %11 = vector.broadcast %cst : f32 to vector<16x512xf32>
    %12 = arith.maximumf %10, %11 : vector<16x512xf32>
    %c0_9 = arith.constant 0 : index
    %c0_10 = arith.constant 0 : index
    %c0_11 = arith.constant 0 : index
    %13 = vector.load %arg5[%c0_9, %c0_10, %c0_11] : memref<1x16x512xf32, #tpu.memory_space<vmem>>, vector<1x16x512xf32>
    %14 = vector.shape_cast %13 : vector<1x16x512xf32> to vector<16x512xf32>
    %15 = vector.shape_cast %12 : vector<16x512xf32> to vector<1x16x512xf32>
    tpu.vector_store %arg5[%c0_9, %c0_10, %c0_11], %15 {strides = array<i32>} : memref<1x16x512xf32, #tpu.memory_space<vmem>>, vector<1x16x512xf32>,
    return
  }
  func.func @transform_0(%arg0: i32) -> (i32, i32, i32) {
    %c0_i32 = arith.constant 0 : i32
    %c0_i32_0 = arith.constant 0 : i32
    %c0_i32_1 = arith.constant 0 : i32
    return %arg0, %c0_i32, %c0_i32_0 : i32, i32, i32
  }
  func.func @transform_1(%arg0: i32) -> (i32, i32) {
    %c0_i32 = arith.constant 0 : i32
    %c0_i32_0 = arith.constant 0 : i32
    %c0_i32_1 = arith.constant 0 : i32
    return %c0_i32, %c0_i32_0 : i32, i32
  }
  func.func @transform_2(%arg0: i32) -> (i32, i32) {
    %c0_i32 = arith.constant 0 : i32
    %c0_i32_0 = arith.constant 0 : i32
    %c0_i32_1 = arith.constant 0 : i32
    return %c0_i32, %c0_i32_0 : i32, i32
  }
  func.func @transform_3(%arg0: i32) -> (i32, i32, i32) {
    %c0_i32 = arith.constant 0 : i32
    %c0_i32_0 = arith.constant 0 : i32
    %c0_i32_1 = arith.constant 0 : i32
    return %arg0, %c0_i32, %c0_i32_0 : i32, i32, i32
  }
  func.func @transform_4(%arg0: i32) -> (i32, i32, i32) {
    %c0_i32 = arith.constant 0 : i32
    %c0_i32_0 = arith.constant 0 : i32
    %c0_i32_1 = arith.constant 0 : i32
    return %arg0, %c0_i32, %c0_i32_0 : i32, i32, i32
  }
}

</mosaic_0001>

<llo_original>
// kernel: bottleneck_forward.4
$region0: #{bottleneck_forward.4}
  #allocation0 [shape = 'u32[]', space=smem, size = 0x4, offset = 0x4, fixed_abs, tag = 'smem constant byte address 0x4 - core index']
  #allocation1 [shape = 'u32[144,128]{1,0:T(1,128)}', space=vmem, size = 0x12000, scoped, tag = 'internal scratch']
  %s0 = inlined_call_operand.vmem [shape: f32[2,16,512], index: 0, kind: input, shape index: {}]
  %s1 = inlined_call_operand.vmem [shape: f32[512,128], index: 1, kind: input, shape index: {}]
  %s2 = inlined_call_operand.vmem [shape: f32[2,16,128], index: 2, kind: output, shape index: {0}]
  %s3 = inlined_call_operand.vmem [shape: f32[2,2,128], index: 3, kind: output, shape index: {1}]
  %4 = xla_tuple %s2, %s3
  %s5 = sld [smem:[#allocation0]]
  $region49: #{bottleneck_forward.4} parent=0
    _
  %s7 = ssub.s32 1, %s5
  %s8 = scalar_select 0, %s7, %s5
  loop: start=0, step=1, limit=4
  $region2: #{bottleneck_forward.4} parent=0 // loop_pre_header
    _
  $region3: #{bottleneck_forward.4} parent=0 // loop_header
    %s10 = sphi 0, %s14
    %p11 = scmp.ge.s32.totalorder %s10, 4
    %s20 = sphi 0, %s22
    %s23 = sphi 0, %s20
    %s24 = sphi 0, %s23
    %s40 = sphi 0, %s24
    %s44 = sphi 0, %s44
    %s46 = sphi 0, %s44
    %s47 = sphi 0, %s46
    %s61 = sphi 0, %s47
    %s67 = sphi 0, %s69
    %s70 = sphi 0, %s67
    %s71 = sphi 0, %s70
    %s87 = sphi 0, %s71
    %s93 = sphi 0, %s95
    %s96 = sphi 0, %s93
    %s97 = sphi 0, %s96
    %s113 = sphi 0, %s97
  $region4: #{bottleneck_forward.4} parent=0 // loop_header_branch
    %13 = sbr.rel (%p11) target = $region8
  $region5: #{bottleneck_forward.4} parent=0 // loop_body
    %s15 = ssub.s32 %s10, 1
    %s16 = ssub.s32 %s10, 2
    %s17 = sadd.s32 %s10, 1
    %s18 = ssub.s32 %s10, %s17
    %p19 = scmp.eq.s32.totalorder %s18, 0
    %s21 = sadd.s32 %s20, 1
    %s22 = scalar_select %p19, %s20, %s21
    %p25 = pneg %p19
    %p26 = scmp.eq.s32.totalorder %s10, 1
    %p27 = por %p25, %p26
    %p28 = scmp.ne.s32.totalorder %s20, %s23
    %p29 = scmp.eq.s32.totalorder %s10, 0
    %p30 = por %p28, %p29
    %p31 = scmp.ne.s32.totalorder %s20, %s23
    %p32 = scmp.eq.s32.totalorder %s15, 1
    %p33 = por %p31, %p32
    %p34 = scmp.ne.s32.totalorder %s23, %s24
    %p35 = scmp.eq.s32.totalorder %s15, 0
    %p36 = por %p34, %p35
    %p37 = scmp.ne.s32.totalorder %s23, %s24
    %p38 = scmp.eq.s32.totalorder %s16, 1
    %p39 = por %p37, %p38
    %p41 = scmp.ne.s32.totalorder %s24, %s40
    %p42 = scmp.eq.s32.totalorder %s16, 0
    %p43 = por %p41, %p42
    %s45 = sadd.s32 %s44, 1
    %p48 = scmp.eq.s32.totalorder %s10, 1
    %p49 = scmp.ne.s32.totalorder %s44, %s46
    %p50 = scmp.eq.s32.totalorder %s10, 0
    %p51 = por %p49, %p50
    %p52 = scmp.ne.s32.totalorder %s44, %s46
    %p53 = scmp.eq.s32.totalorder %s15, 1
    %p54 = por %p52, %p53
    %p55 = scmp.ne.s32.totalorder %s46, %s47
    %p56 = scmp.eq.s32.totalorder %s15, 0
    %p57 = por %p55, %p56
    %p58 = scmp.ne.s32.totalorder %s46, %s47
    %p59 = scmp.eq.s32.totalorder %s16, 1
    %p60 = por %p58, %p59
    %p62 = scmp.ne.s32.totalorder %s47, %s61
    %p63 = scmp.eq.s32.totalorder %s16, 0
    %p64 = por %p62, %p63
    %s65 = ssub.s32 %s10, %s17
    %p66 = scmp.eq.s32.totalorder %s65, 0
    %s68 = sadd.s32 %s67, 1
    %s69 = scalar_select %p66, %s67, %s68
    %p72 = pneg %p66
    %p73 = scmp.eq.s32.totalorder %s10, 1
    %p74 = por %p72, %p73
    %p75 = scmp.ne.s32.totalorder %s67, %s70
    %p76 = scmp.eq.s32.totalorder %s10, 0
    %p77 = por %p75, %p76
    %p78 = scmp.ne.s32.totalorder %s67, %s70
    %p79 = scmp.eq.s32.totalorder %s15, 1
    %p80 = por %p78, %p79
    %p81 = scmp.ne.s32.totalorder %s70, %s71
    %p82 = scmp.eq.s32.totalorder %s15, 0
    %p83 = por %p81, %p82
    %p84 = scmp.ne.s32.totalorder %s70, %s71
    %p85 = scmp.eq.s32.totalorder %s16, 1
    %p86 = por %p84, %p85
    %p88 = scmp.ne.s32.totalorder %s71, %s87
    %p89 = scmp.eq.s32.totalorder %s16, 0
    %p90 = por %p88, %p89
    %s91 = ssub.s32 %s10, %s17
    %p92 = scmp.eq.s32.totalorder %s91, 0
    %s94 = sadd.s32 %s93, 1
    %s95 = scalar_select %p92, %s93, %s94
    %p98 = pneg %p92
    %p99 = scmp.eq.s32.totalorder %s10, 1
    %p100 = por %p98, %p99
    %p101 = scmp.ne.s32.totalorder %s93, %s96
    %p102 = scmp.eq.s32.totalorder %s10, 0
    %p103 = por %p101, %p102
    %p104 = scmp.ne.s32.totalorder %s93, %s96
    %p105 = scmp.eq.s32.totalorder %s15, 1
    %p106 = por %p104, %p105
    %p107 = scmp.ne.s32.totalorder %s96, %s97
    %p108 = scmp.eq.s32.totalorder %s15, 0
    %p109 = por %p107, %p108
    %p110 = scmp.ne.s32.totalorder %s96, %s97
    %p111 = scmp.eq.s32.totalorder %s16, 1
    %p112 = por %p110, %p111
    %p114 = scmp.ne.s32.totalorder %s97, %s113
    %p115 = scmp.eq.s32.totalorder %s16, 0
    %p116 = por %p114, %p115
    %p117 = scmp.le.s32.totalorder 1, %s10
    %p118 = scmp.lt.s32.totalorder %s10, 3
    %p119 = pnand %p117, %p118
    %p120 = pneg %p119
    // Predicated region
    $region9: #{bottleneck_forward.4} parent=5 // pred_check
      _
    $region10: #{bottleneck_forward.4} parent=5 // pred_check_branch
      %122 = sbr.rel (%p119) target = $region12
    $region11: #{bottleneck_forward.4} parent=5 // pred_region
      %s123 = ssub.s32 %s10, 1
      // Predicated region
      $region13: #{bottleneck_forward.4} parent=11 // pred_check
        %p124 = pneg %p57
      $region14: #{bottleneck_forward.4} parent=11 // pred_check_branch
        %126 = sbr.rel (%p124) target = $region16
      $region15: #{bottleneck_forward.4} parent=11 // pred_region
        _
      $region16: #{bottleneck_forward.4} parent=11 // pred_fallthru
        _
    $region12: #{bottleneck_forward.4} parent=5 // pred_fallthru
      _
    %p127 = scmp.lt.s32.totalorder %s10, 2
    // Predicated region
    $region17: #{bottleneck_forward.4} parent=5 // pred_check
      %p128 = pneg %p127
    $region18: #{bottleneck_forward.4} parent=5 // pred_check_branch
      %130 = sbr.rel (%p128) target = $region20
    $region19: #{bottleneck_forward.4} parent=5 // pred_region
      // Predicated region
      $region21: #{bottleneck_forward.4} parent=19 // pred_check
        %p131 = pneg %p30
      $region22: #{bottleneck_forward.4} parent=19 // pred_check_branch
        %133 = sbr.rel (%p131) target = $region24
      $region23: #{bottleneck_forward.4} parent=19 // pred_region
        %p134 = scmp.lt.s32.totalorder %s10, 1
        %s135 = scalar_select %p134, %s10, 1
        %s136 = smul.addr %s135, 8
        %s137 = smul.addr %s136, 8
        %s138 = scalar_lea.vmem %s0, %s137
      $region24: #{bottleneck_forward.4} parent=19 // pred_fallthru
        _
    $region20: #{bottleneck_forward.4} parent=5 // pred_fallthru
      _
    %p139 = scmp.le.s32.totalorder 1, %s10
    %p140 = scmp.lt.s32.totalorder %s10, 3
    %p141 = pnand %p139, %p140
    %p142 = pneg %p141
    // Predicated region
    $region25: #{bottleneck_forward.4} parent=5 // pred_check
      _
    $region26: #{bottleneck_forward.4} parent=5 // pred_check_branch
      %144 = sbr.rel (%p141) target = $region28
    $region27: #{bottleneck_forward.4} parent=5 // pred_region
      %s145 = ssub.s32 %s10, 1
      %p146 = scmp.lt.s32.totalorder %s15, 1
      %s147 = scalar_select %p146, %s15, 1
      %s148 = smul.addr %s147, 8
      %s149 = smul.addr %s148, 8
      %s150 = scalar_lea.vmem %s0, %s149
      %p151 = pneg %p36
      %p152 = pneg %p33
      %p153 = pneg %p57
      %p154 = pneg %p54
      %p155 = pneg %p83
      %p156 = pneg %p80
      %p157 = scmp.lt.s32.totalorder %s15, 1
      %s158 = scalar_select %p157, %s15, 1
      %s159 = smul.addr %s158, 2
      %s160 = smul.addr %s159, 8
      %s161 = scalar_lea.vmem %s2, %s160
      %p162 = pneg %p109
      %p163 = pneg %p106
      %p164 = scmp.lt.s32.totalorder %s15, 1
      %s165 = scalar_select %p164, %s15, 1
      %s166 = smul.addr %s165, 2
      %s167 = scalar_lea.vmem %s3, %s166
      %p168 = scmp.lt.s32.totalorder %s15, 1
      %s169 = scalar_select %p168, %s15, 1
      %s170 = smul.addr %s169, 8
      %s171 = smul.addr %s170, 8
      %s172 = scalar_lea.vmem %s0, %s171
      %p173 = scmp.lt.s32.totalorder %s15, 1
      %s174 = scalar_select %p173, %s15, 1
      %s175 = smul.addr %s174, 2
      %s176 = smul.addr %s175, 8
      %s177 = scalar_lea.vmem %s2, %s176
      %p178 = scmp.lt.s32.totalorder %s15, 1
      %s179 = scalar_select %p178, %s15, 1
      %s180 = smul.addr %s179, 2
      %s181 = scalar_lea.vmem %s3, %s180
      %v182 = vld [vmem:[%s172] sm:$0xff]
      %v183 = vld [vmem:[%s172 + $0x8] sm:$0xff]
      %v184 = vld [vmem:[%s172 + $0x10] sm:$0xff]
      %v185 = vld [vmem:[%s172 + $0x18] sm:$0xff]
      %v186 = vld [vmem:[%s172 + $0x20] sm:$0xff]
      %v187 = vld [vmem:[%s172 + $0x28] sm:$0xff]
      %v188 = vld [vmem:[%s172 + $0x30] sm:$0xff]
      %v189 = vld [vmem:[%s172 + $0x38] sm:$0xff]
      %v190 = vld [vmem:[%s1] sm:$0xff]
      %v191 = vld [vmem:[%s1 + $0x8] sm:$0xff]
      %v192 = vld [vmem:[%s1 + $0x10] sm:$0xff]
      %v193 = vld [vmem:[%s1 + $0x18] sm:$0xff]
      %v194 = vld [vmem:[%s1 + $0x20] sm:$0xff]
      %v195 = vld [vmem:[%s1 + $0x28] sm:$0xff]
      %v196 = vld [vmem:[%s1 + $0x30] sm:$0xff]
      %v197 = vld [vmem:[%s1 + $0x38] sm:$0xff]
      %v198 = vld [vmem:[%s1 + $0x40] sm:$0xff]
      %v199 = vld [vmem:[%s1 + $0x48] sm:$0xff]
      %v200 = vld [vmem:[%s1 + $0x50] sm:$0xff]
      %v201 = vld [vmem:[%s1 + $0x58] sm:$0xff]
      %v202 = vld [vmem:[%s1 + $0x60] sm:$0xff]
      %v203 = vld [vmem:[%s1 + $0x68] sm:$0xff]
      %v204 = vld [vmem:[%s1 + $0x70] sm:$0xff]
      %v205 = vld [vmem:[%s1 + $0x78] sm:$0xff]
      %v206 = vld [vmem:[%s1 + $0x80] sm:$0xff]
      %v207 = vld [vmem:[%s1 + $0x88] sm:$0xff]
      %v208 = vld [vmem:[%s1 + $0x90] sm:$0xff]
      %v209 = vld [vmem:[%s1 + $0x98] sm:$0xff]
      %v210 = vld [vmem:[%s1 + $0xa0] sm:$0xff]
      %v211 = vld [vmem:[%s1 + $0xa8] sm:$0xff]
      %v212 = vld [vmem:[%s1 + $0xb0] sm:$0xff]
      %v213 = vld [vmem:[%s1 + $0xb8] sm:$0xff]
      %v214 = vld [vmem:[%s1 + $0xc0] sm:$0xff]
      %v215 = vld [vmem:[%s1 + $0xc8] sm:$0xff]
      %v216 = vld [vmem:[%s1 + $0xd0] sm:$0xff]
      %v217 = vld [vmem:[%s1 + $0xd8] sm:$0xff]
      %v218 = vld [vmem:[%s1 + $0xe0] sm:$0xff]
      %v219 = vld [vmem:[%s1 + $0xe8] sm:$0xff]
      %v220 = vld [vmem:[%s1 + $0xf0] sm:$0xff]
      %v221 = vld [vmem:[%s1 + $0xf8] sm:$0xff]
      %v222 = vld [vmem:[%s1 + $0x100] sm:$0xff]
      %v223 = vld [vmem:[%s1 + $0x108] sm:$0xff]
      %v224 = vld [vmem:[%s1 + $0x110] sm:$0xff]
      %v225 = vld [vmem:[%s1 + $0x118] sm:$0xff]
      %v226 = vld [vmem:[%s1 + $0x120] sm:$0xff]
      %v227 = vld [vmem:[%s1 + $0x128] sm:$0xff]
      %v228 = vld [vmem:[%s1 + $0x130] sm:$0xff]
      %v229 = vld [vmem:[%s1 + $0x138] sm:$0xff]
      %v230 = vld [vmem:[%s1 + $0x140] sm:$0xff]
      %v231 = vld [vmem:[%s1 + $0x148] sm:$0xff]
      %v232 = vld [vmem:[%s1 + $0x150] sm:$0xff]
      %v233 = vld [vmem:[%s1 + $0x158] sm:$0xff]
      %v234 = vld [vmem:[%s1 + $0x160] sm:$0xff]
      %v235 = vld [vmem:[%s1 + $0x168] sm:$0xff]
      %v236 = vld [vmem:[%s1 + $0x170] sm:$0xff]
      %v237 = vld [vmem:[%s1 + $0x178] sm:$0xff]
      %v238 = vld [vmem:[%s1 + $0x180] sm:$0xff]
      %v239 = vld [vmem:[%s1 + $0x188] sm:$0xff]
      %v240 = vld [vmem:[%s1 + $0x190] sm:$0xff]
      %v241 = vld [vmem:[%s1 + $0x198] sm:$0xff]
      %v242 = vld [vmem:[%s1 + $0x1a0] sm:$0xff]
      %v243 = vld [vmem:[%s1 + $0x1a8] sm:$0xff]
      %v244 = vld [vmem:[%s1 + $0x1b0] sm:$0xff]
      %v245 = vld [vmem:[%s1 + $0x1b8] sm:$0xff]
      %v246 = vld [vmem:[%s1 + $0x1c0] sm:$0xff]
      %v247 = vld [vmem:[%s1 + $0x1c8] sm:$0xff]
      %v248 = vld [vmem:[%s1 + $0x1d0] sm:$0xff]
      %v249 = vld [vmem:[%s1 + $0x1d8] sm:$0xff]
      %v250 = vld [vmem:[%s1 + $0x1e0] sm:$0xff]
      %v251 = vld [vmem:[%s1 + $0x1e8] sm:$0xff]
      %v252 = vld [vmem:[%s1 + $0x1f0] sm:$0xff]
      %v253 = vld [vmem:[%s1 + $0x1f8] sm:$0xff]
      %254 = vmatprep.subr.mxu0 0.0
      %255 = vmatpush1.msra.mxu0 %v190
      %256 = vmatprep.subr.mxu0 0.0
      %257 = vmatpush1.msra.mxu0 %v191
      %258 = vmatprep.subr.mxu0 0.0
      %259 = vmatpush1.msra.mxu0 %v192
      %260 = vmatprep.subr.mxu0 0.0
      %261 = vmatpush1.msra.mxu0 %v193
      %262 = vmatprep.subr.mxu0 0.0
      %263 = vmatpush1.msra.mxu0 %v194
      %264 = vmatprep.subr.mxu0 0.0
      %265 = vmatpush1.msra.mxu0 %v195
      %266 = vmatprep.subr.mxu0 0.0
      %267 = vmatpush1.msra.mxu0 %v196
      %268 = vmatprep.subr.mxu0 0.0
      %269 = vmatpush1.msra.mxu0 %v197
      %270 = vmatprep.subr.mxu0 0.0
      %271 = vmatpush1.msra.mxu0 %v198
      %272 = vmatprep.subr.mxu0 0.0
      %273 = vmatpush1.msra.mxu0 %v199
      %274 = vmatprep.subr.mxu0 0.0
      %275 = vmatpush1.msra.mxu0 %v200
      %276 = vmatprep.subr.mxu0 0.0
      %277 = vmatpush1.msra.mxu0 %v201
      %278 = vmatprep.subr.mxu0 0.0
      %279 = vmatpush1.msra.mxu0 %v202
      %280 = vmatprep.subr.mxu0 0.0
      %281 = vmatpush1.msra.mxu0 %v203
      %282 = vmatprep.subr.mxu0 0.0
      %283 = vmatpush1.msra.mxu0 %v204
      %284 = vmatprep.subr.mxu0 0.0
      %285 = vmatpush1.msra.mxu0 %v205
      %286 = vmatprep.subr.mxu0 0.0
      %287 = vmatpush1.msra.mxu0 %v206
      %288 = vmatprep.subr.mxu0 0.0
      %289 = vmatpush1.msra.mxu0 %v207
      %290 = vmatprep.subr.mxu0 0.0
      %291 = vmatpush1.msra.mxu0 %v208
      %292 = vmatprep.subr.mxu0 0.0
      %293 = vmatpush1.msra.mxu0 %v209
      %294 = vmatprep.subr.mxu0 0.0
      %295 = vmatpush1.msra.mxu0 %v210
      %296 = vmatprep.subr.mxu0 0.0
      %297 = vmatpush1.msra.mxu0 %v211
      %298 = vmatprep.subr.mxu0 0.0
      %299 = vmatpush1.msra.mxu0 %v212
      %300 = vmatprep.subr.mxu0 0.0
      %301 = vmatpush1.msra.mxu0 %v213
      %302 = vmatprep.subr.mxu0 0.0
      %303 = vmatpush1.msra.mxu0 %v214
      %304 = vmatprep.subr.mxu0 0.0
      %305 = vmatpush1.msra.mxu0 %v215
      %306 = vmatprep.subr.mxu0 0.0
      %307 = vmatpush1.msra.mxu0 %v216
      %308 = vmatprep.subr.mxu0 0.0
      %309 = vmatpush1.msra.mxu0 %v217
      %310 = vmatprep.subr.mxu0 0.0
      %311 = vmatpush1.msra.mxu0 %v218
      %312 = vmatprep.subr.mxu0 0.0
      %313 = vmatpush1.msra.mxu0 %v219
      %314 = vmatprep.subr.mxu0 0.0
      %315 = vmatpush1.msra.mxu0 %v220
      %316 = vmatprep.subr.mxu0 0.0
      %317 = vmatpush1.msra.mxu0 %v221
      %318 = vmatprep.mubr.f32.mxu0 %v183
      %319 = vmatmul.mubr.f32.gmra.mrb[0].mxu0 %v182
      %v320 = vpop.f32.mrb[0].mxu0
      %v321 = vadd.f32 0.0, %v320
      %v322 = vpop.f32.mrb[0].mxu0
      %323 = vmatprep.mubr.f32.mxu0 %v187
      %324 = vmatmul.mubr.f32.gmra.mrb[0].mxu0 %v186
      %v325 = vpop.f32.mrb[0].mxu0
      %v326 = vadd.f32 0.0, %v325
      %v327 = vpop.f32.mrb[0].mxu0
      %328 = vdwg.mxu0
      %329 = vmatprep.subr.mxu0 0.0
      %330 = vmatpush1.msra.mxu0 %v222
      %331 = vmatprep.subr.mxu0 0.0
      %332 = vmatpush1.msra.mxu0 %v223
      %333 = vmatprep.subr.mxu0 0.0
      %334 = vmatpush1.msra.mxu0 %v224
      %335 = vmatprep.subr.mxu0 0.0
      %336 = vmatpush1.msra.mxu0 %v225
      %337 = vmatprep.subr.mxu0 0.0
      %338 = vmatpush1.msra.mxu0 %v226
      %339 = vmatprep.subr.mxu0 0.0
      %340 = vmatpush1.msra.mxu0 %v227
      %341 = vmatprep.subr.mxu0 0.0
      %342 = vmatpush1.msra.mxu0 %v228
      %343 = vmatprep.subr.mxu0 0.0
      %344 = vmatpush1.msra.mxu0 %v229
      %345 = vmatprep.subr.mxu0 0.0
      %346 = vmatpush1.msra.mxu0 %v230
      %347 = vmatprep.subr.mxu0 0.0
      %348 = vmatpush1.msra.mxu0 %v231
      %349 = vmatprep.subr.mxu0 0.0
      %350 = vmatpush1.msra.mxu0 %v232
      %351 = vmatprep.subr.mxu0 0.0
      %352 = vmatpush1.msra.mxu0 %v233
      %353 = vmatprep.subr.mxu0 0.0
      %354 = vmatpush1.msra.mxu0 %v234
      %355 = vmatprep.subr.mxu0 0.0
      %356 = vmatpush1.msra.mxu0 %v235
      %357 = vmatprep.subr.mxu0 0.0
      %358 = vmatpush1.msra.mxu0 %v236
      %359 = vmatprep.subr.mxu0 0.0
      %360 = vmatpush1.msra.mxu0 %v237
      %361 = vmatprep.subr.mxu0 0.0
      %362 = vmatpush1.msra.mxu0 %v238
      %363 = vmatprep.subr.mxu0 0.0
      %364 = vmatpush1.msra.mxu0 %v239
      %365 = vmatprep.subr.mxu0 0.0
      %366 = vmatpush1.msra.mxu0 %v240
      %367 = vmatprep.subr.mxu0 0.0
      %368 = vmatpush1.msra.mxu0 %v241
      %369 = vmatprep.subr.mxu0 0.0
      %370 = vmatpush1.msra.mxu0 %v242
      %371 = vmatprep.subr.mxu0 0.0
      %372 = vmatpush1.msra.mxu0 %v243
      %373 = vmatprep.subr.mxu0 0.0
      %374 = vmatpush1.msra.mxu0 %v244
      %375 = vmatprep.subr.mxu0 0.0
      %376 = vmatpush1.msra.mxu0 %v245
      %377 = vmatprep.subr.mxu0 0.0
      %378 = vmatpush1.msra.mxu0 %v246
      %379 = vmatprep.subr.mxu0 0.0
      %380 = vmatpush1.msra.mxu0 %v247
      %381 = vmatprep.subr.mxu0 0.0
      %382 = vmatpush1.msra.mxu0 %v248
      %383 = vmatprep.subr.mxu0 0.0
      %384 = vmatpush1.msra.mxu0 %v249
      %385 = vmatprep.subr.mxu0 0.0
      %386 = vmatpush1.msra.mxu0 %v250
      %387 = vmatprep.subr.mxu0 0.0
      %388 = vmatpush1.msra.mxu0 %v251
      %389 = vmatprep.subr.mxu0 0.0
      %390 = vmatpush1.msra.mxu0 %v252
      %391 = vmatprep.subr.mxu0 0.0
      %392 = vmatpush1.msra.mxu0 %v253
      %393 = vmatprep.mubr.f32.mxu0 %v185
      %394 = vmatmul.mubr.f32.gmra.mrb[0].mxu0 %v184
      %v395 = vpop.f32.mrb[0].mxu0
      %v396 = vadd.f32 %v321, %v395
      %v397 = vpop.f32.mrb[0].mxu0
      %398 = vmatprep.mubr.f32.mxu0 %v189
      %399 = vmatmul.mubr.f32.gmra.mrb[0].mxu0 %v188
      %v400 = vpop.f32.mrb[0].mxu0
      %v401 = vadd.f32 %v326, %v400
      %v402 = vpop.f32.mrb[0].mxu0
      %403 = vdwg.mxu0
      %404 = vst [vmem:[%s177] sm:$0xff] %v396
      %405 = vst [vmem:[%s177 + $0x8] sm:$0xff] %v401
      %v406 = vadd.f32 %v396, %v401
      %v407 = vrot.slane %v406, 4
      %v408 = vadd.f32 %v406, %v407
      %v409 = vrot.slane %v408, 2
      %v410 = vadd.f32 %v408, %v409
      %v411 = vrot.slane %v410, 1
      %v412 = vadd.f32 %v410, %v411
      %v413 = vmul.f32 %v396, %v396
      %v414 = vmul.f32 %v401, %v401
      %v415 = vadd.f32 %v413, %v414
      %v416 = vrot.slane %v415, 4
      %v417 = vadd.f32 %v415, %v416
      %v418 = vrot.slane %v417, 2
      %v419 = vadd.f32 %v417, %v418
      %v420 = vrot.slane %v419, 1
      %v421 = vadd.f32 %v419, %v420
      %vm422 = vcmask 1040384
      %v423 = vsel %vm422, %v412, %v421
      %424 = vst [vmem:[%s181] sm:$0x3] %v423
      %p425 = scmp.lt.s32.totalorder %s15, 1
      %s426 = scalar_select %p425, %s15, 1
      %s427 = smul.addr %s426, 2
      %s428 = smul.addr %s427, 8
      %s429 = scalar_lea.vmem %s2, %s428
      %p430 = scmp.lt.s32.totalorder %s15, 1
      %s431 = scalar_select %p430, %s15, 1
      %s432 = smul.addr %s431, 2
      %s433 = scalar_lea.vmem %s3, %s432
      // Predicated region
      $region29: #{bottleneck_forward.4} parent=27 // pred_check
        %p434 = pneg %p80
      $region30: #{bottleneck_forward.4} parent=27 // pred_check_branch
        %436 = sbr.rel (%p434) target = $region32
      $region31: #{bottleneck_forward.4} parent=27 // pred_region
        _
      $region32: #{bottleneck_forward.4} parent=27 // pred_fallthru
        _
      // Predicated region
      $region33: #{bottleneck_forward.4} parent=27 // pred_check
        %p437 = pneg %p106
      $region34: #{bottleneck_forward.4} parent=27 // pred_check_branch
        %439 = sbr.rel (%p437) target = $region36
      $region35: #{bottleneck_forward.4} parent=27 // pred_region
        _
      $region36: #{bottleneck_forward.4} parent=27 // pred_fallthru
        _
    $region28: #{bottleneck_forward.4} parent=5 // pred_fallthru
      _
    %p440 = scmp.le.s32.totalorder 2, %s10
    // Predicated region
    $region37: #{bottleneck_forward.4} parent=5 // pred_check
      %p441 = pneg %p440
    $region38: #{bottleneck_forward.4} parent=5 // pred_check_branch
      %443 = sbr.rel (%p441) target = $region40
    $region39: #{bottleneck_forward.4} parent=5 // pred_region
      %s444 = ssub.s32 %s10, 2
      // Predicated region
      $region41: #{bottleneck_forward.4} parent=39 // pred_check
        %p445 = pneg %p86
      $region42: #{bottleneck_forward.4} parent=39 // pred_check_branch
        %447 = sbr.rel (%p445) target = $region44
      $region43: #{bottleneck_forward.4} parent=39 // pred_region
        %p448 = scmp.lt.s32.totalorder %s16, 1
        %s449 = scalar_select %p448, %s16, 1
        %s450 = smul.addr %s449, 2
        %s451 = smul.addr %s450, 8
        %s452 = scalar_lea.vmem %s2, %s451
      $region44: #{bottleneck_forward.4} parent=39 // pred_fallthru
        _
      // Predicated region
      $region45: #{bottleneck_forward.4} parent=39 // pred_check
        %p453 = pneg %p112
      $region46: #{bottleneck_forward.4} parent=39 // pred_check_branch
        %455 = sbr.rel (%p453) target = $region48
      $region47: #{bottleneck_forward.4} parent=39 // pred_region
        %p456 = scmp.lt.s32.totalorder %s16, 1
        %s457 = scalar_select %p456, %s16, 1
        %s458 = smul.addr %s457, 2
        %s459 = scalar_lea.vmem %s3, %s458
      $region48: #{bottleneck_forward.4} parent=39 // pred_fallthru
        _
    $region40: #{bottleneck_forward.4} parent=5 // pred_fallthru
      _
  $region6: #{bottleneck_forward.4} parent=0 // loop_footer
    %s14 = sadd.s32 1, %s10
  $region7: #{bottleneck_forward.4} parent=0 // loop_footer_branch
    %9 = sbr.rel target = $region3
  $region8: #{bottleneck_forward.4} parent=0 // loop_exit
    _

// kernel: tile.33
$region0: #{tile.33}
  #allocation0 [shape = 's32[1]{0}', space=sflag, size = 0x4, scoped, tag = 'scoped memory for tile.33']
  %s0 = inlined_call_operand.vmem [shape: f32[8], index: 0, kind: input, shape index: {}]
  %s1 = inlined_call_operand.vmem [shape: f32[16,8], index: 1, kind: output, shape index: {}]
  // Predicated region
  $region2: #{tile.33} parent=0 // pred_check
    _
  $region3: #{tile.33} parent=0 // pred_check_branch
    %3 = sbr.rel (0) target = $region5
  $region4: #{tile.33} parent=0 // pred_region
    _
  $region5: #{tile.33} parent=0 // pred_fallthru
    _
  %v4 = vld [vmem:[%s0] ss:$0 sm:$0xff]
  %5 = vst [vmem:[%s1] sm:$0xff] %v4
  %s6 = scalar_lea.vmem %s1, 8
  %7 = vst [vmem:[%s6] sm:$0xff] %v4

// kernel: tile.34
$region0: #{tile.34}
  %s0 = inlined_call_operand.vmem [shape: f32[16,8], index: 0, kind: input, shape index: {}]
  %s1 = inlined_call_operand.vmem [shape: f32[1,128], index: 1, kind: output, shape index: {}]
  $region1: #{tile.34} parent=0
    #allocation0 [shape = 'u8[4096]{0}', space=vmem, size = 0x1000, scoped, tag = 'scoped mem for output reshape']
    %v2 = vld [vmem:[%s0] sm:$0x1]
    %vm3 = vcmask 64512
    %4 = vst.msk [vmem:[#allocation0] sm:$0x1] %vm3, %v2
    %s5 = scalar_lea.vmem %s0, 15
    %v6 = vld [vmem:[%s5] sm:$0x1]
    %7 = vrot.lane.b32.xlu0 %v6, 120
    %v8 = vpop.permute.xlu0 %7
    %vm9 = vcmask 1048512
    %10 = vst.msk [vmem:[#allocation0] sm:$0x1] %vm9, %v8
    %s11 = scalar_lea.vmem %s0, 14
    %v12 = vld [vmem:[%s11] sm:$0x1]
    %13 = vrot.lane.b32.xlu0 %v12, 112
    %v14 = vpop.permute.xlu0 %13
    %vm15 = vcmask 982912
    %16 = vst.msk [vmem:[#allocation0] sm:$0x1] %vm15, %v14
    %s17 = scalar_lea.vmem %s0, 13
    %v18 = vld [vmem:[%s17] sm:$0x1]
    %19 = vrot.lane.b32.xlu0 %v18, 104
    %v20 = vpop.permute.xlu0 %19
    %vm21 = vcmask 917312
    %22 = vst.msk [vmem:[#allocation0] sm:$0x1] %vm21, %v20
    %s23 = scalar_lea.vmem %s0, 12
    %v24 = vld [vmem:[%s23] sm:$0x1]
    %25 = vrot.lane.b32.xlu0 %v24, 96
    %v26 = vpop.permute.xlu0 %25
    %vm27 = vcmask 851712
    %28 = vst.msk [vmem:[#allocation0] sm:$0x1] %vm27, %v26
    %s29 = scalar_lea.vmem %s0, 11
    %v30 = vld [vmem:[%s29] sm:$0x1]
    %31 = vrot.lane.b32.xlu0 %v30, 88
    %v32 = vpop.permute.xlu0 %31
    %vm33 = vcmask 786112
    %34 = vst.msk [vmem:[#allocation0] sm:$0x1] %vm33, %v32
    %s35 = scalar_lea.vmem %s0, 10
    %v36 = vld [vmem:[%s35] sm:$0x1]
    %37 = vrot.lane.b32.xlu0 %v36, 80
    %v38 = vpop.permute.xlu0 %37
    %vm39 = vcmask 720512
    %40 = vst.msk [vmem:[#allocation0] sm:$0x1] %vm39, %v38
    %s41 = scalar_lea.vmem %s0, 9
    %v42 = vld [vmem:[%s41] sm:$0x1]
    %43 = vrot.lane.b32.xlu0 %v42, 72
    %v44 = vpop.permute.xlu0 %43
    %vm45 = vcmask 654912
    %46 = vst.msk [vmem:[#allocation0] sm:$0x1] %vm45, %v44
    %s47 = scalar_lea.vmem %s0, 8
    %v48 = vld [vmem:[%s47] sm:$0x1]
    %49 = vrot.lane.b32.xlu0 %v48, 64
    %v50 = vpop.permute.xlu0 %49
    %vm51 = vcmask 589312
    %52 = vst.msk [vmem:[#allocation0] sm:$0x1] %vm51, %v50
    %s53 = scalar_lea.vmem %s0, 7
    %v54 = vld [vmem:[%s53] sm:$0x1]
    %55 = vrot.lane.b32.xlu0 %v54, 56
    %v56 = vpop.permute.xlu0 %55
    %vm57 = vcmask 523712
    %58 = vst.msk [vmem:[#allocation0] sm:$0x1] %vm57, %v56
    %s59 = scalar_lea.vmem %s0, 6
    %v60 = vld [vmem:[%s59] sm:$0x1]
    %61 = vrot.lane.b32.xlu0 %v60, 48
    %v62 = vpop.permute.xlu0 %61
    %vm63 = vcmask 458112
    %64 = vst.msk [vmem:[#allocation0] sm:$0x1] %vm63, %v62
    %s65 = scalar_lea.vmem %s0, 5
    %v66 = vld [vmem:[%s65] sm:$0x1]
    %67 = vrot.lane.b32.xlu0 %v66, 40
    %v68 = vpop.permute.xlu0 %67
    %vm69 = vcmask 392512
    %70 = vst.msk [vmem:[#allocation0] sm:$0x1] %vm69, %v68
    %s71 = scalar_lea.vmem %s0, 4
    %v72 = vld [vmem:[%s71] sm:$0x1]
    %73 = vrot.lane.b32.xlu0 %v72, 32
    %v74 = vpop.permute.xlu0 %73
    %vm75 = vcmask 326912
    %76 = vst.msk [vmem:[#allocation0] sm:$0x1] %vm75, %v74
    %s77 = scalar_lea.vmem %s0, 3
    %v78 = vld [vmem:[%s77] sm:$0x1]
    %79 = vrot.lane.b32.xlu0 %v78, 24
    %v80 = vpop.permute.xlu0 %79
    %vm81 = vcmask 261312
    %82 = vst.msk [vmem:[#allocation0] sm:$0x1] %vm81, %v80
    %s83 = scalar_lea.vmem %s0, 2
    %v84 = vld [vmem:[%s83] sm:$0x1]
    %85 = vrot.lane.b32.xlu0 %v84, 16
    %v86 = vpop.permute.xlu0 %85
    %vm87 = vcmask 195712
    %88 = vst.msk [vmem:[#allocation0] sm:$0x1] %vm87, %v86
    %s89 = scalar_lea.vmem %s0, 1
    %v90 = vld [vmem:[%s89] sm:$0x1]
    %91 = vrot.lane.b32.xlu0 %v90, 8
    %v92 = vpop.permute.xlu0 %91
    %vm93 = vcmask 130112
    %94 = vst.msk [vmem:[#allocation0] sm:$0x1] %vm93, %v92
    %s96 = sshllo.u32 0, 1
    %v98 = vld [vmem:[#allocation0] sm:%s96]
    %s99 = sshllo.u32 0, 1
    %100 = vst [vmem:[%s1] sm:%s99] %v98

// kernel: bottleneck_forward.5
$region0: #{bottleneck_forward.5}
  #allocation0 [shape = 'u32[]', space=smem, size = 0x4, offset = 0x4, fixed_abs, tag = 'smem constant byte address 0x4 - core index']
  #allocation1 [shape = 'u32[144,128]{1,0:T(1,128)}', space=vmem, size = 0x12000, scoped, tag = 'internal scratch']
  %s0 = inlined_call_operand.vmem [shape: f32[2,16,128], index: 0, kind: input, shape index: {}]
  %s1 = inlined_call_operand.vmem [shape: f32[1,128], index: 1, kind: input, shape index: {}]
  %s2 = inlined_call_operand.vmem [shape: f32[1,128], index: 2, kind: input, shape index: {}]
  %s3 = inlined_call_operand.vmem [shape: f32[3,128,128], index: 3, kind: input, shape index: {}]
  %s4 = inlined_call_operand.vmem [shape: f32[2,16,128], index: 4, kind: output, shape index: {0}]
  %s5 = inlined_call_operand.vmem [shape: f32[2,2,128], index: 5, kind: output, shape index: {1}]
  %6 = xla_tuple %s4, %s5
  %s7 = sld [smem:[#allocation0]]
  $region57: #{bottleneck_forward.5} parent=0
    _
  %s9 = ssub.s32 1, %s7
  %s10 = scalar_select 0, %s9, %s7
  loop: start=0, step=1, limit=4
  $region2: #{bottleneck_forward.5} parent=0 // loop_pre_header
    _
  $region3: #{bottleneck_forward.5} parent=0 // loop_header
    %s12 = sphi 0, %s16
    %p13 = scmp.ge.s32.totalorder %s12, 4
    %s22 = sphi 0, %s24
    %s25 = sphi 0, %s22
    %s26 = sphi 0, %s25
    %s42 = sphi 0, %s26
    %s46 = sphi 0, %s46
    %s48 = sphi 0, %s46
    %s49 = sphi 0, %s48
    %s63 = sphi 0, %s49
    %s67 = sphi 0, %s67
    %s69 = sphi 0, %s67
    %s70 = sphi 0, %s69
    %s84 = sphi 0, %s70
    %s88 = sphi 0, %s88
    %s90 = sphi 0, %s88
    %s91 = sphi 0, %s90
    %s105 = sphi 0, %s91
    %s111 = sphi 0, %s113
    %s114 = sphi 0, %s111
    %s115 = sphi 0, %s114
    %s131 = sphi 0, %s115
    %s137 = sphi 0, %s139
    %s140 = sphi 0, %s137
    %s141 = sphi 0, %s140
    %s157 = sphi 0, %s141
  $region4: #{bottleneck_forward.5} parent=0 // loop_header_branch
    %15 = sbr.rel (%p13) target = $region8
  $region5: #{bottleneck_forward.5} parent=0 // loop_body
    %s17 = ssub.s32 %s12, 1
    %s18 = ssub.s32 %s12, 2
    %s19 = sadd.s32 %s12, 1
    %s20 = ssub.s32 %s12, %s19
    %p21 = scmp.eq.s32.totalorder %s20, 0
    %s23 = sadd.s32 %s22, 1
    %s24 = scalar_select %p21, %s22, %s23
    %p27 = pneg %p21
    %p28 = scmp.eq.s32.totalorder %s12, 1
    %p29 = por %p27, %p28
    %p30 = scmp.ne.s32.totalorder %s22, %s25
    %p31 = scmp.eq.s32.totalorder %s12, 0
    %p32 = por %p30, %p31
    %p33 = scmp.ne.s32.totalorder %s22, %s25
    %p34 = scmp.eq.s32.totalorder %s17, 1
    %p35 = por %p33, %p34
    %p36 = scmp.ne.s32.totalorder %s25, %s26
    %p37 = scmp.eq.s32.totalorder %s17, 0
    %p38 = por %p36, %p37
    %p39 = scmp.ne.s32.totalorder %s25, %s26
    %p40 = scmp.eq.s32.totalorder %s18, 1
    %p41 = por %p39, %p40
    %p43 = scmp.ne.s32.totalorder %s26, %s42
    %p44 = scmp.eq.s32.totalorder %s18, 0
    %p45 = por %p43, %p44
    %s47 = sadd.s32 %s46, 1
    %p50 = scmp.eq.s32.totalorder %s12, 1
    %p51 = scmp.ne.s32.totalorder %s46, %s48
    %p52 = scmp.eq.s32.totalorder %s12, 0
    %p53 = por %p51, %p52
    %p54 = scmp.ne.s32.totalorder %s46, %s48
    %p55 = scmp.eq.s32.totalorder %s17, 1
    %p56 = por %p54, %p55
    %p57 = scmp.ne.s32.totalorder %s48, %s49
    %p58 = scmp.eq.s32.totalorder %s17, 0
    %p59 = por %p57, %p58
    %p60 = scmp.ne.s32.totalorder %s48, %s49
    %p61 = scmp.eq.s32.totalorder %s18, 1
    %p62 = por %p60, %p61
    %p64 = scmp.ne.s32.totalorder %s49, %s63
    %p65 = scmp.eq.s32.totalorder %s18, 0
    %p66 = por %p64, %p65
    %s68 = sadd.s32 %s67, 1
    %p71 = scmp.eq.s32.totalorder %s12, 1
    %p72 = scmp.ne.s32.totalorder %s67, %s69
    %p73 = scmp.eq.s32.totalorder %s12, 0
    %p74 = por %p72, %p73
    %p75 = scmp.ne.s32.totalorder %s67, %s69
    %p76 = scmp.eq.s32.totalorder %s17, 1
    %p77 = por %p75, %p76
    %p78 = scmp.ne.s32.totalorder %s69, %s70
    %p79 = scmp.eq.s32.totalorder %s17, 0
    %p80 = por %p78, %p79
    %p81 = scmp.ne.s32.totalorder %s69, %s70
    %p82 = scmp.eq.s32.totalorder %s18, 1
    %p83 = por %p81, %p82
    %p85 = scmp.ne.s32.totalorder %s70, %s84
    %p86 = scmp.eq.s32.totalorder %s18, 0
    %p87 = por %p85, %p86
    %s89 = sadd.s32 %s88, 1
    %p92 = scmp.eq.s32.totalorder %s12, 1
    %p93 = scmp.ne.s32.totalorder %s88, %s90
    %p94 = scmp.eq.s32.totalorder %s12, 0
    %p95 = por %p93, %p94
    %p96 = scmp.ne.s32.totalorder %s88, %s90
    %p97 = scmp.eq.s32.totalorder %s17, 1
    %p98 = por %p96, %p97
    %p99 = scmp.ne.s32.totalorder %s90, %s91
    %p100 = scmp.eq.s32.totalorder %s17, 0
    %p101 = por %p99, %p100
    %p102 = scmp.ne.s32.totalorder %s90, %s91
    %p103 = scmp.eq.s32.totalorder %s18, 1
    %p104 = por %p102, %p103
    %p106 = scmp.ne.s32.totalorder %s91, %s105
    %p107 = scmp.eq.s32.totalorder %s18, 0
    %p108 = por %p106, %p107
    %s109 = ssub.s32 %s12, %s19
    %p110 = scmp.eq.s32.totalorder %s109, 0
    %s112 = sadd.s32 %s111, 1
    %s113 = scalar_select %p110, %s111, %s112
    %p116 = pneg %p110
    %p117 = scmp.eq.s32.totalorder %s12, 1
    %p118 = por %p116, %p117
    %p119 = scmp.ne.s32.totalorder %s111, %s114
    %p120 = scmp.eq.s32.totalorder %s12, 0
    %p121 = por %p119, %p120
    %p122 = scmp.ne.s32.totalorder %s111, %s114
    %p123 = scmp.eq.s32.totalorder %s17, 1
    %p124 = por %p122, %p123
    %p125 = scmp.ne.s32.totalorder %s114, %s115
    %p126 = scmp.eq.s32.totalorder %s17, 0
    %p127 = por %p125, %p126
    %p128 = scmp.ne.s32.totalorder %s114, %s115
    %p129 = scmp.eq.s32.totalorder %s18, 1
    %p130 = por %p128, %p129
    %p132 = scmp.ne.s32.totalorder %s115, %s131
    %p133 = scmp.eq.s32.totalorder %s18, 0
    %p134 = por %p132, %p133
    %s135 = ssub.s32 %s12, %s19
    %p136 = scmp.eq.s32.totalorder %s135, 0
    %s138 = sadd.s32 %s137, 1
    %s139 = scalar_select %p136, %s137, %s138
    %p142 = pneg %p136
    %p143 = scmp.eq.s32.totalorder %s12, 1
    %p144 = por %p142, %p143
    %p145 = scmp.ne.s32.totalorder %s137, %s140
    %p146 = scmp.eq.s32.totalorder %s12, 0
    %p147 = por %p145, %p146
    %p148 = scmp.ne.s32.totalorder %s137, %s140
    %p149 = scmp.eq.s32.totalorder %s17, 1
    %p150 = por %p148, %p149
    %p151 = scmp.ne.s32.totalorder %s140, %s141
    %p152 = scmp.eq.s32.totalorder %s17, 0
    %p153 = por %p151, %p152
    %p154 = scmp.ne.s32.totalorder %s140, %s141
    %p155 = scmp.eq.s32.totalorder %s18, 1
    %p156 = por %p154, %p155
    %p158 = scmp.ne.s32.totalorder %s141, %s157
    %p159 = scmp.eq.s32.totalorder %s18, 0
    %p160 = por %p158, %p159
    %p161 = scmp.le.s32.totalorder 1, %s12
    %p162 = scmp.lt.s32.totalorder %s12, 3
    %p163 = pnand %p161, %p162
    %p164 = pneg %p163
    // Predicated region
    $region9: #{bottleneck_forward.5} parent=5 // pred_check
      _
    $region10: #{bottleneck_forward.5} parent=5 // pred_check_branch
      %166 = sbr.rel (%p163) target = $region12
    $region11: #{bottleneck_forward.5} parent=5 // pred_region
      %s167 = ssub.s32 %s12, 1
      // Predicated region
      $region13: #{bottleneck_forward.5} parent=11 // pred_check
        %p168 = pneg %p59
      $region14: #{bottleneck_forward.5} parent=11 // pred_check_branch
        %170 = sbr.rel (%p168) target = $region16
      $region15: #{bottleneck_forward.5} parent=11 // pred_region
        _
      $region16: #{bottleneck_forward.5} parent=11 // pred_fallthru
        _
      // Predicated region
      $region17: #{bottleneck_forward.5} parent=11 // pred_check
        %p171 = pneg %p80
      $region18: #{bottleneck_forward.5} parent=11 // pred_check_branch
        %173 = sbr.rel (%p171) target = $region20
      $region19: #{bottleneck_forward.5} parent=11 // pred_region
        _
      $region20: #{bottleneck_forward.5} parent=11 // pred_fallthru
        _
      // Predicated region
      $region21: #{bottleneck_forward.5} parent=11 // pred_check
        %p174 = pneg %p101
      $region22: #{bottleneck_forward.5} parent=11 // pred_check_branch
        %176 = sbr.rel (%p174) target = $region24
      $region23: #{bottleneck_forward.5} parent=11 // pred_region
        _
      $region24: #{bottleneck_forward.5} parent=11 // pred_fallthru
        _
    $region12: #{bottleneck_forward.5} parent=5 // pred_fallthru
      _
    %p177 = scmp.lt.s32.totalorder %s12, 2
    // Predicated region
    $region25: #{bottleneck_forward.5} parent=5 // pred_check
      %p178 = pneg %p177
    $region26: #{bottleneck_forward.5} parent=5 // pred_check_branch
      %180 = sbr.rel (%p178) target = $region28
    $region27: #{bottleneck_forward.5} parent=5 // pred_region
      // Predicated region
      $region29: #{bottleneck_forward.5} parent=27 // pred_check
        %p181 = pneg %p32
      $region30: #{bottleneck_forward.5} parent=27 // pred_check_branch
        %183 = sbr.rel (%p181) target = $region32
      $region31: #{bottleneck_forward.5} parent=27 // pred_region
        %p184 = scmp.lt.s32.totalorder %s12, 1
        %s185 = scalar_select %p184, %s12, 1
        %s186 = smul.addr %s185, 2
        %s187 = smul.addr %s186, 8
        %s188 = scalar_lea.vmem %s0, %s187
      $region32: #{bottleneck_forward.5} parent=27 // pred_fallthru
        _
    $region28: #{bottleneck_forward.5} parent=5 // pred_fallthru
      _
    %p189 = scmp.le.s32.totalorder 1, %s12
    %p190 = scmp.lt.s32.totalorder %s12, 3
    %p191 = pnand %p189, %p190
    %p192 = pneg %p191
    // Predicated region
    $region33: #{bottleneck_forward.5} parent=5 // pred_check
      _
    $region34: #{bottleneck_forward.5} parent=5 // pred_check_branch
      %194 = sbr.rel (%p191) target = $region36
    $region35: #{bottleneck_forward.5} parent=5 // pred_region
      %s195 = ssub.s32 %s12, 1
      %p196 = scmp.lt.s32.totalorder %s17, 1
      %s197 = scalar_select %p196, %s17, 1
      %s198 = smul.addr %s197, 2
      %s199 = smul.addr %s198, 8
      %s200 = scalar_lea.vmem %s0, %s199
      %p201 = pneg %p38
      %p202 = pneg %p35
      %p203 = pneg %p59
      %p204 = pneg %p56
      %p205 = pneg %p80
      %p206 = pneg %p77
      %p207 = pneg %p101
      %p208 = pneg %p98
      %p209 = pneg %p127
      %p210 = pneg %p124
      %p211 = scmp.lt.s32.totalorder %s17, 1
      %s212 = scalar_select %p211, %s17, 1
      %s213 = smul.addr %s212, 2
      %s214 = smul.addr %s213, 8
      %s215 = scalar_lea.vmem %s4, %s214
      %p216 = pneg %p153
      %p217 = pneg %p150
      %p218 = scmp.lt.s32.totalorder %s17, 1
      %s219 = scalar_select %p218, %s17, 1
      %s220 = smul.addr %s219, 2
      %s221 = scalar_lea.vmem %s5, %s220
      %p222 = scmp.lt.s32.totalorder %s17, 1
      %s223 = scalar_select %p222, %s17, 1
      %s224 = smul.addr %s223, 2
      %s225 = smul.addr %s224, 8
      %s226 = scalar_lea.vmem %s0, %s225
      %p227 = scmp.lt.s32.totalorder %s17, 1
      %s228 = scalar_select %p227, %s17, 1
      %s229 = smul.addr %s228, 2
      %s230 = smul.addr %s229, 8
      %s231 = scalar_lea.vmem %s4, %s230
      %p232 = scmp.lt.s32.totalorder %s17, 1
      %s233 = scalar_select %p232, %s17, 1
      %s234 = smul.addr %s233, 2
      %s235 = scalar_lea.vmem %s5, %s234
      %v236 = vld [vmem:[%s226] sm:$0xff]
      %v237 = vld [vmem:[%s226 + $0x8] sm:$0xff]
      %v238 = vld [vmem:[%s1] sm:$0x1]
      %v240 = vlaneseq
      %v241 = vshrl.u32 %v240, 7
      %v242 = vsub.s32 0, %v241
      %v243 = vrot.slane %v238, %v242
      %v245 = vmul.f32 %v236, %v243
      %v246 = vmul.f32 %v237, %v243
      %v247 = vld [vmem:[%s2] sm:$0x1]
      %v249 = vlaneseq
      %v250 = vshrl.u32 %v249, 7
      %v251 = vsub.s32 0, %v250
      %v252 = vrot.slane %v247, %v251
      %v254 = vadd.f32 %v245, %v252
      %v255 = vadd.f32 %v246, %v252
      %v256 = vmax.f32 %v254, 0.0
      %v257 = vmax.f32 %v255, 0.0
      %vm260 = vcmask 1040384
      %v261 = vrot.slane %v256, 7
      %v262 = vrot.slane %v257, 7
      %v263 = vsel %vm260, %v261, %v262
      %v266 = vsel %vm260, 0.0, %v261
      %vm267 = vcmask 1046528
      %v268 = vrot.slane %v256, 1
      %v269 = vrot.slane %v257, 1
      %v270 = vsel %vm267, %v268, %v269
      %v273 = vsel %vm267, %v269, 0.0
      %s274 = scalar_lea.vmem %s3, 128
      %v275 = vld [vmem:[%s274] sm:$0xff]
      %v276 = vld [vmem:[%s274 + $0x8] sm:$0xff]
      %v277 = vld [vmem:[%s274 + $0x10] sm:$0xff]
      %v278 = vld [vmem:[%s274 + $0x18] sm:$0xff]
      %v279 = vld [vmem:[%s274 + $0x20] sm:$0xff]
      %v280 = vld [vmem:[%s274 + $0x28] sm:$0xff]
      %v281 = vld [vmem:[%s274 + $0x30] sm:$0xff]
      %v282 = vld [vmem:[%s274 + $0x38] sm:$0xff]
      %v283 = vld [vmem:[%s274 + $0x40] sm:$0xff]
      %v284 = vld [vmem:[%s274 + $0x48] sm:$0xff]
      %v285 = vld [vmem:[%s274 + $0x50] sm:$0xff]
      %v286 = vld [vmem:[%s274 + $0x58] sm:$0xff]
      %v287 = vld [vmem:[%s274 + $0x60] sm:$0xff]
      %v288 = vld [vmem:[%s274 + $0x68] sm:$0xff]
      %v289 = vld [vmem:[%s274 + $0x70] sm:$0xff]
      %v290 = vld [vmem:[%s274 + $0x78] sm:$0xff]
      %v291 = vld [vmem:[%s3] sm:$0xff]
      %v292 = vld [vmem:[%s3 + $0x8] sm:$0xff]
      %v293 = vld [vmem:[%s3 + $0x10] sm:$0xff]
      %v294 = vld [vmem:[%s3 + $0x18] sm:$0xff]
      %v295 = vld [vmem:[%s3 + $0x20] sm:$0xff]
      %v296 = vld [vmem:[%s3 + $0x28] sm:$0xff]
      %v297 = vld [vmem:[%s3 + $0x30] sm:$0xff]
      %v298 = vld [vmem:[%s3 + $0x38] sm:$0xff]
      %v299 = vld [vmem:[%s3 + $0x40] sm:$0xff]
      %v300 = vld [vmem:[%s3 + $0x48] sm:$0xff]
      %v301 = vld [vmem:[%s3 + $0x50] sm:$0xff]
      %v302 = vld [vmem:[%s3 + $0x58] sm:$0xff]
      %v303 = vld [vmem:[%s3 + $0x60] sm:$0xff]
      %v304 = vld [vmem:[%s3 + $0x68] sm:$0xff]
      %v305 = vld [vmem:[%s3 + $0x70] sm:$0xff]
      %v306 = vld [vmem:[%s3 + $0x78] sm:$0xff]
      %307 = vmatprep.subr.mxu0 0.0
      %308 = vmatpush1.msra.mxu0 %v291
      %309 = vmatprep.subr.mxu0 0.0
      %310 = vmatpush1.msra.mxu0 %v292
      %311 = vmatprep.subr.mxu0 0.0
      %312 = vmatpush1.msra.mxu0 %v293
      %313 = vmatprep.subr.mxu0 0.0
      %314 = vmatpush1.msra.mxu0 %v294
      %315 = vmatprep.subr.mxu0 0.0
      %316 = vmatpush1.msra.mxu0 %v295
      %317 = vmatprep.subr.mxu0 0.0
      %318 = vmatpush1.msra.mxu0 %v296
      %319 = vmatprep.subr.mxu0 0.0
      %320 = vmatpush1.msra.mxu0 %v297
      %321 = vmatprep.subr.mxu0 0.0
      %322 = vmatpush1.msra.mxu0 %v298
      %323 = vmatprep.subr.mxu0 0.0
      %324 = vmatpush1.msra.mxu0 %v299
      %325 = vmatprep.subr.mxu0 0.0
      %326 = vmatpush1.msra.mxu0 %v300
      %327 = vmatprep.subr.mxu0 0.0
      %328 = vmatpush1.msra.mxu0 %v301
      %329 = vmatprep.subr.mxu0 0.0
      %330 = vmatpush1.msra.mxu0 %v302
      %331 = vmatprep.subr.mxu0 0.0
      %332 = vmatpush1.msra.mxu0 %v303
      %333 = vmatprep.subr.mxu0 0.0
      %334 = vmatpush1.msra.mxu0 %v304
      %335 = vmatprep.subr.mxu0 0.0
      %336 = vmatpush1.msra.mxu0 %v305
      %337 = vmatprep.subr.mxu0 0.0
      %338 = vmatpush1.msra.mxu0 %v306
      %339 = vmatprep.subr.mxu0 0.0
      %340 = vmatpush1.msra.mxu0 0.0
      %341 = vmatprep.subr.mxu0 0.0
      %342 = vmatpush1.msra.mxu0 0.0
      %343 = vmatprep.subr.mxu0 0.0
      %344 = vmatpush1.msra.mxu0 0.0
      %345 = vmatprep.subr.mxu0 0.0
      %346 = vmatpush1.msra.mxu0 0.0
      %347 = vmatprep.subr.mxu0 0.0
      %348 = vmatpush1.msra.mxu0 0.0
      %349 = vmatprep.subr.mxu0 0.0
      %350 = vmatpush1.msra.mxu0 0.0
      %351 = vmatprep.subr.mxu0 0.0
      %352 = vmatpush1.msra.mxu0 0.0
      %353 = vmatprep.subr.mxu0 0.0
      %354 = vmatpush1.msra.mxu0 0.0
      %355 = vmatprep.subr.mxu0 0.0
      %356 = vmatpush1.msra.mxu0 0.0
      %357 = vmatprep.subr.mxu0 0.0
      %358 = vmatpush1.msra.mxu0 0.0
      %359 = vmatprep.subr.mxu0 0.0
      %360 = vmatpush1.msra.mxu0 0.0
      %361 = vmatprep.subr.mxu0 0.0
      %362 = vmatpush1.msra.mxu0 0.0
      %363 = vmatprep.subr.mxu0 0.0
      %364 = vmatpush1.msra.mxu0 0.0
      %365 = vmatprep.subr.mxu0 0.0
      %366 = vmatpush1.msra.mxu0 0.0
      %367 = vmatprep.subr.mxu0 0.0
      %368 = vmatpush1.msra.mxu0 0.0
      %369 = vmatprep.subr.mxu0 0.0
      %370 = vmatpush1.msra.mxu0 0.0
      %371 = vmatprep.mubr.f32.mxu0 0.0
      %372 = vmatmul.mubr.f32.gmra.mrb[0].mxu0 %v266
      %v373 = vpop.f32.mrb[0].mxu0
      %v374 = vadd.f32 0.0, %v373
      %v375 = vpop.f32.mrb[0].mxu0
      %376 = vmatprep.mubr.f32.mxu0 0.0
      %377 = vmatmul.mubr.f32.gmra.mrb[0].mxu0 %v263
      %v378 = vpop.f32.mrb[0].mxu0
      %v379 = vadd.f32 0.0, %v378
      %v380 = vpop.f32.mrb[0].mxu0
      %381 = vdwg.mxu0
      %382 = vmatprep.subr.mxu0 0.0
      %383 = vmatpush1.msra.mxu0 %v275
      %384 = vmatprep.subr.mxu0 0.0
      %385 = vmatpush1.msra.mxu0 %v276
      %386 = vmatprep.subr.mxu0 0.0
      %387 = vmatpush1.msra.mxu0 %v277
      %388 = vmatprep.subr.mxu0 0.0
      %389 = vmatpush1.msra.mxu0 %v278
      %390 = vmatprep.subr.mxu0 0.0
      %391 = vmatpush1.msra.mxu0 %v279
      %392 = vmatprep.subr.mxu0 0.0
      %393 = vmatpush1.msra.mxu0 %v280
      %394 = vmatprep.subr.mxu0 0.0
      %395 = vmatpush1.msra.mxu0 %v281
      %396 = vmatprep.subr.mxu0 0.0
      %397 = vmatpush1.msra.mxu0 %v282
      %398 = vmatprep.subr.mxu0 0.0
      %399 = vmatpush1.msra.mxu0 %v283
      %400 = vmatprep.subr.mxu0 0.0
      %401 = vmatpush1.msra.mxu0 %v284
      %402 = vmatprep.subr.mxu0 0.0
      %403 = vmatpush1.msra.mxu0 %v285
      %404 = vmatprep.subr.mxu0 0.0
      %405 = vmatpush1.msra.mxu0 %v286
      %406 = vmatprep.subr.mxu0 0.0
      %407 = vmatpush1.msra.mxu0 %v287
      %408 = vmatprep.subr.mxu0 0.0
      %409 = vmatpush1.msra.mxu0 %v288
      %410 = vmatprep.subr.mxu0 0.0
      %411 = vmatpush1.msra.mxu0 %v289
      %412 = vmatprep.subr.mxu0 0.0
      %413 = vmatpush1.msra.mxu0 %v290
      %414 = vmatprep.subr.mxu0 0.0
      %415 = vmatpush1.msra.mxu0 0.0
      %416 = vmatprep.subr.mxu0 0.0
      %417 = vmatpush1.msra.mxu0 0.0
      %418 = vmatprep.subr.mxu0 0.0
      %419 = vmatpush1.msra.mxu0 0.0
      %420 = vmatprep.subr.mxu0 0.0
      %421 = vmatpush1.msra.mxu0 0.0
      %422 = vmatprep.subr.mxu0 0.0
      %423 = vmatpush1.msra.mxu0 0.0
      %424 = vmatprep.subr.mxu0 0.0
      %425 = vmatpush1.msra.mxu0 0.0
      %426 = vmatprep.subr.mxu0 0.0
      %427 = vmatpush1.msra.mxu0 0.0
      %428 = vmatprep.subr.mxu0 0.0
      %429 = vmatpush1.msra.mxu0 0.0
      %430 = vmatprep.subr.mxu0 0.0
      %431 = vmatpush1.msra.mxu0 0.0
      %432 = vmatprep.subr.mxu0 0.0
      %433 = vmatpush1.msra.mxu0 0.0
      %434 = vmatprep.subr.mxu0 0.0
      %435 = vmatpush1.msra.mxu0 0.0
      %436 = vmatprep.subr.mxu0 0.0
      %437 = vmatpush1.msra.mxu0 0.0
      %438 = vmatprep.subr.mxu0 0.0
      %439 = vmatpush1.msra.mxu0 0.0
      %440 = vmatprep.subr.mxu0 0.0
      %441 = vmatpush1.msra.mxu0 0.0
      %442 = vmatprep.subr.mxu0 0.0
      %443 = vmatpush1.msra.mxu0 0.0
      %444 = vmatprep.subr.mxu0 0.0
      %445 = vmatpush1.msra.mxu0 0.0
      %446 = vmatprep.mubr.f32.mxu0 0.0
      %447 = vmatmul.mubr.f32.gmra.mrb[0].mxu0 %v256
      %v448 = vpop.f32.mrb[0].mxu0
      %v449 = vadd.f32 %v374, %v448
      %v450 = vpop.f32.mrb[0].mxu0
      %451 = vmatprep.mubr.f32.mxu0 0.0
      %452 = vmatmul.mubr.f32.gmra.mrb[0].mxu0 %v257
      %v453 = vpop.f32.mrb[0].mxu0
      %v454 = vadd.f32 %v379, %v453
      %v455 = vpop.f32.mrb[0].mxu0
      %456 = vdwg.mxu0
      %s457 = scalar_lea.vmem %s3, 256
      %v458 = vld [vmem:[%s457] sm:$0xff]
      %v459 = vld [vmem:[%s457 + $0x8] sm:$0xff]
      %v460 = vld [vmem:[%s457 + $0x10] sm:$0xff]
      %v461 = vld [vmem:[%s457 + $0x18] sm:$0xff]
      %v462 = vld [vmem:[%s457 + $0x20] sm:$0xff]
      %v463 = vld [vmem:[%s457 + $0x28] sm:$0xff]
      %v464 = vld [vmem:[%s457 + $0x30] sm:$0xff]
      %v465 = vld [vmem:[%s457 + $0x38] sm:$0xff]
      %v466 = vld [vmem:[%s457 + $0x40] sm:$0xff]
      %v467 = vld [vmem:[%s457 + $0x48] sm:$0xff]
      %v468 = vld [vmem:[%s457 + $0x50] sm:$0xff]
      %v469 = vld [vmem:[%s457 + $0x58] sm:$0xff]
      %v470 = vld [vmem:[%s457 + $0x60] sm:$0xff]
      %v471 = vld [vmem:[%s457 + $0x68] sm:$0xff]
      %v472 = vld [vmem:[%s457 + $0x70] sm:$0xff]
      %v473 = vld [vmem:[%s457 + $0x78] sm:$0xff]
      %474 = vmatprep.subr.mxu0 0.0
      %475 = vmatpush1.msra.mxu0 %v458
      %476 = vmatprep.subr.mxu0 0.0
      %477 = vmatpush1.msra.mxu0 %v459
      %478 = vmatprep.subr.mxu0 0.0
      %479 = vmatpush1.msra.mxu0 %v460
      %480 = vmatprep.subr.mxu0 0.0
      %481 = vmatpush1.msra.mxu0 %v461
      %482 = vmatprep.subr.mxu0 0.0
      %483 = vmatpush1.msra.mxu0 %v462
      %484 = vmatprep.subr.mxu0 0.0
      %485 = vmatpush1.msra.mxu0 %v463
      %486 = vmatprep.subr.mxu0 0.0
      %487 = vmatpush1.msra.mxu0 %v464
      %488 = vmatprep.subr.mxu0 0.0
      %489 = vmatpush1.msra.mxu0 %v465
      %490 = vmatprep.subr.mxu0 0.0
      %491 = vmatpush1.msra.mxu0 %v466
      %492 = vmatprep.subr.mxu0 0.0
      %493 = vmatpush1.msra.mxu0 %v467
      %494 = vmatprep.subr.mxu0 0.0
      %495 = vmatpush1.msra.mxu0 %v468
      %496 = vmatprep.subr.mxu0 0.0
      %497 = vmatpush1.msra.mxu0 %v469
      %498 = vmatprep.subr.mxu0 0.0
      %499 = vmatpush1.msra.mxu0 %v470
      %500 = vmatprep.subr.mxu0 0.0
      %501 = vmatpush1.msra.mxu0 %v471
      %502 = vmatprep.subr.mxu0 0.0
      %503 = vmatpush1.msra.mxu0 %v472
      %504 = vmatprep.subr.mxu0 0.0
      %505 = vmatpush1.msra.mxu0 %v473
      %506 = vmatprep.subr.mxu0 0.0
      %507 = vmatpush1.msra.mxu0 0.0
      %508 = vmatprep.subr.mxu0 0.0
      %509 = vmatpush1.msra.mxu0 0.0
      %510 = vmatprep.subr.mxu0 0.0
      %511 = vmatpush1.msra.mxu0 0.0
      %512 = vmatprep.subr.mxu0 0.0
      %513 = vmatpush1.msra.mxu0 0.0
      %514 = vmatprep.subr.mxu0 0.0
      %515 = vmatpush1.msra.mxu0 0.0
      %516 = vmatprep.subr.mxu0 0.0
      %517 = vmatpush1.msra.mxu0 0.0
      %518 = vmatprep.subr.mxu0 0.0
      %519 = vmatpush1.msra.mxu0 0.0
      %520 = vmatprep.subr.mxu0 0.0
      %521 = vmatpush1.msra.mxu0 0.0
      %522 = vmatprep.subr.mxu0 0.0
      %523 = vmatpush1.msra.mxu0 0.0
      %524 = vmatprep.subr.mxu0 0.0
      %525 = vmatpush1.msra.mxu0 0.0
      %526 = vmatprep.subr.mxu0 0.0
      %527 = vmatpush1.msra.mxu0 0.0
      %528 = vmatprep.subr.mxu0 0.0
      %529 = vmatpush1.msra.mxu0 0.0
      %530 = vmatprep.subr.mxu0 0.0
      %531 = vmatpush1.msra.mxu0 0.0
      %532 = vmatprep.subr.mxu0 0.0
      %533 = vmatpush1.msra.mxu0 0.0
      %534 = vmatprep.subr.mxu0 0.0
      %535 = vmatpush1.msra.mxu0 0.0
      %536 = vmatprep.subr.mxu0 0.0
      %537 = vmatpush1.msra.mxu0 0.0
      %538 = vmatprep.mubr.f32.mxu0 0.0
      %539 = vmatmul.mubr.f32.gmra.mrb[0].mxu0 %v270
      %v540 = vpop.f32.mrb[0].mxu0
      %v541 = vadd.f32 0.0, %v540
      %v542 = vpop.f32.mrb[0].mxu0
      %543 = vmatprep.mubr.f32.mxu0 0.0
      %544 = vmatmul.mubr.f32.gmra.mrb[0].mxu0 %v273
      %v545 = vpop.f32.mrb[0].mxu0
      %v546 = vadd.f32 0.0, %v545
      %v547 = vpop.f32.mrb[0].mxu0
      %548 = vdwg.mxu0
      %v549 = vadd.f32 %v449, %v541
      %v550 = vadd.f32 %v454, %v546
      %551 = vst [vmem:[%s231] sm:$0xff] %v549
      %552 = vst [vmem:[%s231 + $0x8] sm:$0xff] %v550
      %v553 = vadd.f32 %v549, %v550
      %v554 = vrot.slane %v553, 4
      %v555 = vadd.f32 %v553, %v554
      %v556 = vrot.slane %v555, 2
      %v557 = vadd.f32 %v555, %v556
      %v558 = vrot.slane %v557, 1
      %v559 = vadd.f32 %v557, %v558
      %v560 = vmul.f32 %v549, %v549
      %v561 = vmul.f32 %v550, %v550
      %v562 = vadd.f32 %v560, %v561
      %v563 = vrot.slane %v562, 4
      %v564 = vadd.f32 %v562, %v563
      %v565 = vrot.slane %v564, 2
      %v566 = vadd.f32 %v564, %v565
      %v567 = vrot.slane %v566, 1
      %v568 = vadd.f32 %v566, %v567
      %v569 = vsel %vm260, %v559, %v568
      %570 = vst [vmem:[%s235] sm:$0x3] %v569
      %p571 = scmp.lt.s32.totalorder %s17, 1
      %s572 = scalar_select %p571, %s17, 1
      %s573 = smul.addr %s572, 2
      %s574 = smul.addr %s573, 8
      %s575 = scalar_lea.vmem %s4, %s574
      %p576 = scmp.lt.s32.totalorder %s17, 1
      %s577 = scalar_select %p576, %s17, 1
      %s578 = smul.addr %s577, 2
      %s579 = scalar_lea.vmem %s5, %s578
      // Predicated region
      $region37: #{bottleneck_forward.5} parent=35 // pred_check
        %p580 = pneg %p124
      $region38: #{bottleneck_forward.5} parent=35 // pred_check_branch
        %582 = sbr.rel (%p580) target = $region40
      $region39: #{bottleneck_forward.5} parent=35 // pred_region
        _
      $region40: #{bottleneck_forward.5} parent=35 // pred_fallthru
        _
      // Predicated region
      $region41: #{bottleneck_forward.5} parent=35 // pred_check
        %p583 = pneg %p150
      $region42: #{bottleneck_forward.5} parent=35 // pred_check_branch
        %585 = sbr.rel (%p583) target = $region44
      $region43: #{bottleneck_forward.5} parent=35 // pred_region
        _
      $region44: #{bottleneck_forward.5} parent=35 // pred_fallthru
        _
    $region36: #{bottleneck_forward.5} parent=5 // pred_fallthru
      _
    %p586 = scmp.le.s32.totalorder 2, %s12
    // Predicated region
    $region45: #{bottleneck_forward.5} parent=5 // pred_check
      %p587 = pneg %p586
    $region46: #{bottleneck_forward.5} parent=5 // pred_check_branch
      %589 = sbr.rel (%p587) target = $region48
    $region47: #{bottleneck_forward.5} parent=5 // pred_region
      %s590 = ssub.s32 %s12, 2
      // Predicated region
      $region49: #{bottleneck_forward.5} parent=47 // pred_check
        %p591 = pneg %p130
      $region50: #{bottleneck_forward.5} parent=47 // pred_check_branch
        %593 = sbr.rel (%p591) target = $region52
      $region51: #{bottleneck_forward.5} parent=47 // pred_region
        %p594 = scmp.lt.s32.totalorder %s18, 1
        %s595 = scalar_select %p594, %s18, 1
        %s596 = smul.addr %s595, 2
        %s597 = smul.addr %s596, 8
        %s598 = scalar_lea.vmem %s4, %s597
      $region52: #{bottleneck_forward.5} parent=47 // pred_fallthru
        _
      // Predicated region
      $region53: #{bottleneck_forward.5} parent=47 // pred_check
        %p599 = pneg %p156
      $region54: #{bottleneck_forward.5} parent=47 // pred_check_branch
        %601 = sbr.rel (%p599) target = $region56
      $region55: #{bottleneck_forward.5} parent=47 // pred_region
        %p602 = scmp.lt.s32.totalorder %s18, 1
        %s603 = scalar_select %p602, %s18, 1
        %s604 = smul.addr %s603, 2
        %s605 = scalar_lea.vmem %s5, %s604
      $region56: #{bottleneck_forward.5} parent=47 // pred_fallthru
        _
    $region48: #{bottleneck_forward.5} parent=5 // pred_fallthru
      _
  $region6: #{bottleneck_forward.5} parent=0 // loop_footer
    %s16 = sadd.s32 1, %s12
  $region7: #{bottleneck_forward.5} parent=0 // loop_footer_branch
    %11 = sbr.rel target = $region3
  $region8: #{bottleneck_forward.5} parent=0 // loop_exit
    _

// kernel: bottleneck_forward.6
$region0: #{bottleneck_forward.6}
  #allocation0 [shape = 'u32[]', space=smem, size = 0x4, offset = 0x4, fixed_abs, tag = 'smem constant byte address 0x4 - core index']
  #allocation1 [shape = 'u32[144,128]{1,0:T(1,128)}', space=vmem, size = 0x12000, scoped, tag = 'internal scratch']
  %s0 = inlined_call_operand.vmem [shape: f32[2,16,128], index: 0, kind: input, shape index: {}]
  %s1 = inlined_call_operand.vmem [shape: f32[1,128], index: 1, kind: input, shape index: {}]
  %s2 = inlined_call_operand.vmem [shape: f32[1,128], index: 2, kind: input, shape index: {}]
  %s3 = inlined_call_operand.vmem [shape: f32[128,512], index: 3, kind: input, shape index: {}]
  %s4 = inlined_call_operand.vmem [shape: f32[2,16,512], index: 4, kind: output, shape index: {0}]
  %s5 = inlined_call_operand.vmem [shape: f32[2,2,512], index: 5, kind: output, shape index: {1}]
  %6 = xla_tuple %s4, %s5
  %s7 = sld [smem:[#allocation0]]
  $region57: #{bottleneck_forward.6} parent=0
    _
  %s9 = ssub.s32 1, %s7
  %s10 = scalar_select 0, %s9, %s7
  loop: start=0, step=1, limit=4
  $region2: #{bottleneck_forward.6} parent=0 // loop_pre_header
    _
  $region3: #{bottleneck_forward.6} parent=0 // loop_header
    %s12 = sphi 0, %s16
    %p13 = scmp.ge.s32.totalorder %s12, 4
    %s22 = sphi 0, %s24
    %s25 = sphi 0, %s22
    %s26 = sphi 0, %s25
    %s42 = sphi 0, %s26
    %s46 = sphi 0, %s46
    %s48 = sphi 0, %s46
    %s49 = sphi 0, %s48
    %s63 = sphi 0, %s49
    %s67 = sphi 0, %s67
    %s69 = sphi 0, %s67
    %s70 = sphi 0, %s69
    %s84 = sphi 0, %s70
    %s88 = sphi 0, %s88
    %s90 = sphi 0, %s88
    %s91 = sphi 0, %s90
    %s105 = sphi 0, %s91
    %s111 = sphi 0, %s113
    %s114 = sphi 0, %s111
    %s115 = sphi 0, %s114
    %s131 = sphi 0, %s115
    %s137 = sphi 0, %s139
    %s140 = sphi 0, %s137
    %s141 = sphi 0, %s140
    %s157 = sphi 0, %s141
  $region4: #{bottleneck_forward.6} parent=0 // loop_header_branch
    %15 = sbr.rel (%p13) target = $region8
  $region5: #{bottleneck_forward.6} parent=0 // loop_body
    %s17 = ssub.s32 %s12, 1
    %s18 = ssub.s32 %s12, 2
    %s19 = sadd.s32 %s12, 1
    %s20 = ssub.s32 %s12, %s19
    %p21 = scmp.eq.s32.totalorder %s20, 0
    %s23 = sadd.s32 %s22, 1
    %s24 = scalar_select %p21, %s22, %s23
    %p27 = pneg %p21
    %p28 = scmp.eq.s32.totalorder %s12, 1
    %p29 = por %p27, %p28
    %p30 = scmp.ne.s32.totalorder %s22, %s25
    %p31 = scmp.eq.s32.totalorder %s12, 0
    %p32 = por %p30, %p31
    %p33 = scmp.ne.s32.totalorder %s22, %s25
    %p34 = scmp.eq.s32.totalorder %s17, 1
    %p35 = por %p33, %p34
    %p36 = scmp.ne.s32.totalorder %s25, %s26
    %p37 = scmp.eq.s32.totalorder %s17, 0
    %p38 = por %p36, %p37
    %p39 = scmp.ne.s32.totalorder %s25, %s26
    %p40 = scmp.eq.s32.totalorder %s18, 1
    %p41 = por %p39, %p40
    %p43 = scmp.ne.s32.totalorder %s26, %s42
    %p44 = scmp.eq.s32.totalorder %s18, 0
    %p45 = por %p43, %p44
    %s47 = sadd.s32 %s46, 1
    %p50 = scmp.eq.s32.totalorder %s12, 1
    %p51 = scmp.ne.s32.totalorder %s46, %s48
    %p52 = scmp.eq.s32.totalorder %s12, 0
    %p53 = por %p51, %p52
    %p54 = scmp.ne.s32.totalorder %s46, %s48
    %p55 = scmp.eq.s32.totalorder %s17, 1
    %p56 = por %p54, %p55
    %p57 = scmp.ne.s32.totalorder %s48, %s49
    %p58 = scmp.eq.s32.totalorder %s17, 0
    %p59 = por %p57, %p58
    %p60 = scmp.ne.s32.totalorder %s48, %s49
    %p61 = scmp.eq.s32.totalorder %s18, 1
    %p62 = por %p60, %p61
    %p64 = scmp.ne.s32.totalorder %s49, %s63
    %p65 = scmp.eq.s32.totalorder %s18, 0
    %p66 = por %p64, %p65
    %s68 = sadd.s32 %s67, 1
    %p71 = scmp.eq.s32.totalorder %s12, 1
    %p72 = scmp.ne.s32.totalorder %s67, %s69
    %p73 = scmp.eq.s32.totalorder %s12, 0
    %p74 = por %p72, %p73
    %p75 = scmp.ne.s32.totalorder %s67, %s69
    %p76 = scmp.eq.s32.totalorder %s17, 1
    %p77 = por %p75, %p76
    %p78 = scmp.ne.s32.totalorder %s69, %s70
    %p79 = scmp.eq.s32.totalorder %s17, 0
    %p80 = por %p78, %p79
    %p81 = scmp.ne.s32.totalorder %s69, %s70
    %p82 = scmp.eq.s32.totalorder %s18, 1
    %p83 = por %p81, %p82
    %p85 = scmp.ne.s32.totalorder %s70, %s84
    %p86 = scmp.eq.s32.totalorder %s18, 0
    %p87 = por %p85, %p86
    %s89 = sadd.s32 %s88, 1
    %p92 = scmp.eq.s32.totalorder %s12, 1
    %p93 = scmp.ne.s32.totalorder %s88, %s90
    %p94 = scmp.eq.s32.totalorder %s12, 0
    %p95 = por %p93, %p94
    %p96 = scmp.ne.s32.totalorder %s88, %s90
    %p97 = scmp.eq.s32.totalorder %s17, 1
    %p98 = por %p96, %p97
    %p99 = scmp.ne.s32.totalorder %s90, %s91
    %p100 = scmp.eq.s32.totalorder %s17, 0
    %p101 = por %p99, %p100
    %p102 = scmp.ne.s32.totalorder %s90, %s91
    %p103 = scmp.eq.s32.totalorder %s18, 1
    %p104 = por %p102, %p103
    %p106 = scmp.ne.s32.totalorder %s91, %s105
    %p107 = scmp.eq.s32.totalorder %s18, 0
    %p108 = por %p106, %p107
    %s109 = ssub.s32 %s12, %s19
    %p110 = scmp.eq.s32.totalorder %s109, 0
    %s112 = sadd.s32 %s111, 1
    %s113 = scalar_select %p110, %s111, %s112
    %p116 = pneg %p110
    %p117 = scmp.eq.s32.totalorder %s12, 1
    %p118 = por %p116, %p117
    %p119 = scmp.ne.s32.totalorder %s111, %s114
    %p120 = scmp.eq.s32.totalorder %s12, 0
    %p121 = por %p119, %p120
    %p122 = scmp.ne.s32.totalorder %s111, %s114
    %p123 = scmp.eq.s32.totalorder %s17, 1
    %p124 = por %p122, %p123
    %p125 = scmp.ne.s32.totalorder %s114, %s115
    %p126 = scmp.eq.s32.totalorder %s17, 0
    %p127 = por %p125, %p126
    %p128 = scmp.ne.s32.totalorder %s114, %s115
    %p129 = scmp.eq.s32.totalorder %s18, 1
    %p130 = por %p128, %p129
    %p132 = scmp.ne.s32.totalorder %s115, %s131
    %p133 = scmp.eq.s32.totalorder %s18, 0
    %p134 = por %p132, %p133
    %s135 = ssub.s32 %s12, %s19
    %p136 = scmp.eq.s32.totalorder %s135, 0
    %s138 = sadd.s32 %s137, 1
    %s139 = scalar_select %p136, %s137, %s138
    %p142 = pneg %p136
    %p143 = scmp.eq.s32.totalorder %s12, 1
    %p144 = por %p142, %p143
    %p145 = scmp.ne.s32.totalorder %s137, %s140
    %p146 = scmp.eq.s32.totalorder %s12, 0
    %p147 = por %p145, %p146
    %p148 = scmp.ne.s32.totalorder %s137, %s140
    %p149 = scmp.eq.s32.totalorder %s17, 1
    %p150 = por %p148, %p149
    %p151 = scmp.ne.s32.totalorder %s140, %s141
    %p152 = scmp.eq.s32.totalorder %s17, 0
    %p153 = por %p151, %p152
    %p154 = scmp.ne.s32.totalorder %s140, %s141
    %p155 = scmp.eq.s32.totalorder %s18, 1
    %p156 = por %p154, %p155
    %p158 = scmp.ne.s32.totalorder %s141, %s157
    %p159 = scmp.eq.s32.totalorder %s18, 0
    %p160 = por %p158, %p159
    %p161 = scmp.le.s32.totalorder 1, %s12
    %p162 = scmp.lt.s32.totalorder %s12, 3
    %p163 = pnand %p161, %p162
    %p164 = pneg %p163
    // Predicated region
    $region9: #{bottleneck_forward.6} parent=5 // pred_check
      _
    $region10: #{bottleneck_forward.6} parent=5 // pred_check_branch
      %166 = sbr.rel (%p163) target = $region12
    $region11: #{bottleneck_forward.6} parent=5 // pred_region
      %s167 = ssub.s32 %s12, 1
      // Predicated region
      $region13: #{bottleneck_forward.6} parent=11 // pred_check
        %p168 = pneg %p59
      $region14: #{bottleneck_forward.6} parent=11 // pred_check_branch
        %170 = sbr.rel (%p168) target = $region16
      $region15: #{bottleneck_forward.6} parent=11 // pred_region
        _
      $region16: #{bottleneck_forward.6} parent=11 // pred_fallthru
        _
      // Predicated region
      $region17: #{bottleneck_forward.6} parent=11 // pred_check
        %p171 = pneg %p80
      $region18: #{bottleneck_forward.6} parent=11 // pred_check_branch
        %173 = sbr.rel (%p171) target = $region20
      $region19: #{bottleneck_forward.6} parent=11 // pred_region
        _
      $region20: #{bottleneck_forward.6} parent=11 // pred_fallthru
        _
      // Predicated region
      $region21: #{bottleneck_forward.6} parent=11 // pred_check
        %p174 = pneg %p101
      $region22: #{bottleneck_forward.6} parent=11 // pred_check_branch
        %176 = sbr.rel (%p174) target = $region24
      $region23: #{bottleneck_forward.6} parent=11 // pred_region
        _
      $region24: #{bottleneck_forward.6} parent=11 // pred_fallthru
        _
    $region12: #{bottleneck_forward.6} parent=5 // pred_fallthru
      _
    %p177 = scmp.lt.s32.totalorder %s12, 2
    // Predicated region
    $region25: #{bottleneck_forward.6} parent=5 // pred_check
      %p178 = pneg %p177
    $region26: #{bottleneck_forward.6} parent=5 // pred_check_branch
      %180 = sbr.rel (%p178) target = $region28
    $region27: #{bottleneck_forward.6} parent=5 // pred_region
      // Predicated region
      $region29: #{bottleneck_forward.6} parent=27 // pred_check
        %p181 = pneg %p32
      $region30: #{bottleneck_forward.6} parent=27 // pred_check_branch
        %183 = sbr.rel (%p181) target = $region32
      $region31: #{bottleneck_forward.6} parent=27 // pred_region
        %p184 = scmp.lt.s32.totalorder %s12, 1
        %s185 = scalar_select %p184, %s12, 1
        %s186 = smul.addr %s185, 2
        %s187 = smul.addr %s186, 8
        %s188 = scalar_lea.vmem %s0, %s187
      $region32: #{bottleneck_forward.6} parent=27 // pred_fallthru
        _
    $region28: #{bottleneck_forward.6} parent=5 // pred_fallthru
      _
    %p189 = scmp.le.s32.totalorder 1, %s12
    %p190 = scmp.lt.s32.totalorder %s12, 3
    %p191 = pnand %p189, %p190
    %p192 = pneg %p191
    // Predicated region
    $region33: #{bottleneck_forward.6} parent=5 // pred_check
      _
    $region34: #{bottleneck_forward.6} parent=5 // pred_check_branch
      %194 = sbr.rel (%p191) target = $region36
    $region35: #{bottleneck_forward.6} parent=5 // pred_region
      %s195 = ssub.s32 %s12, 1
      %p196 = scmp.lt.s32.totalorder %s17, 1
      %s197 = scalar_select %p196, %s17, 1
      %s198 = smul.addr %s197, 2
      %s199 = smul.addr %s198, 8
      %s200 = scalar_lea.vmem %s0, %s199
      %p201 = pneg %p38
      %p202 = pneg %p35
      %p203 = pneg %p59
      %p204 = pneg %p56
      %p205 = pneg %p80
      %p206 = pneg %p77
      %p207 = pneg %p101
      %p208 = pneg %p98
      %p209 = pneg %p127
      %p210 = pneg %p124
      %p211 = scmp.lt.s32.totalorder %s17, 1
      %s212 = scalar_select %p211, %s17, 1
      %s213 = smul.addr %s212, 8
      %s214 = smul.addr %s213, 8
      %s215 = scalar_lea.vmem %s4, %s214
      %p216 = pneg %p153
      %p217 = pneg %p150
      %p218 = scmp.lt.s32.totalorder %s17, 1
      %s219 = scalar_select %p218, %s17, 1
      %s220 = smul.addr %s219, 4
      %s221 = smul.addr %s220, 2
      %s222 = scalar_lea.vmem %s5, %s221
      %p223 = scmp.lt.s32.totalorder %s17, 1
      %s224 = scalar_select %p223, %s17, 1
      %s225 = smul.addr %s224, 2
      %s226 = smul.addr %s225, 8
      %s227 = scalar_lea.vmem %s0, %s226
      %p228 = scmp.lt.s32.totalorder %s17, 1
      %s229 = scalar_select %p228, %s17, 1
      %s230 = smul.addr %s229, 8
      %s231 = smul.addr %s230, 8
      %s232 = scalar_lea.vmem %s4, %s231
      %p233 = scmp.lt.s32.totalorder %s17, 1
      %s234 = scalar_select %p233, %s17, 1
      %s235 = smul.addr %s234, 4
      %s236 = smul.addr %s235, 2
      %s237 = scalar_lea.vmem %s5, %s236
      %v238 = vld [vmem:[%s227] sm:$0xff]
      %v239 = vld [vmem:[%s227 + $0x8] sm:$0xff]
      %v240 = vld [vmem:[%s1] sm:$0x1]
      %v242 = vlaneseq
      %v243 = vshrl.u32 %v242, 7
      %v244 = vsub.s32 0, %v243
      %v245 = vrot.slane %v240, %v244
      %v247 = vmul.f32 %v238, %v245
      %v248 = vmul.f32 %v239, %v245
      %v249 = vld [vmem:[%s2] sm:$0x1]
      %v251 = vlaneseq
      %v252 = vshrl.u32 %v251, 7
      %v253 = vsub.s32 0, %v252
      %v254 = vrot.slane %v249, %v253
      %v256 = vadd.f32 %v247, %v254
      %v257 = vadd.f32 %v248, %v254
      %v258 = vmax.f32 %v256, 0.0
      %v259 = vmax.f32 %v257, 0.0
      %v260 = vld [vmem:[%s3] sm:$0xff]
      %v261 = vld [vmem:[%s3 + $0x8] sm:$0xff]
      %v262 = vld [vmem:[%s3 + $0x10] sm:$0xff]
      %v263 = vld [vmem:[%s3 + $0x18] sm:$0xff]
      %v264 = vld [vmem:[%s3 + $0x20] sm:$0xff]
      %v265 = vld [vmem:[%s3 + $0x28] sm:$0xff]
      %v266 = vld [vmem:[%s3 + $0x30] sm:$0xff]
      %v267 = vld [vmem:[%s3 + $0x38] sm:$0xff]
      %v268 = vld [vmem:[%s3 + $0x40] sm:$0xff]
      %v269 = vld [vmem:[%s3 + $0x48] sm:$0xff]
      %v270 = vld [vmem:[%s3 + $0x50] sm:$0xff]
      %v271 = vld [vmem:[%s3 + $0x58] sm:$0xff]
      %v272 = vld [vmem:[%s3 + $0x60] sm:$0xff]
      %v273 = vld [vmem:[%s3 + $0x68] sm:$0xff]
      %v274 = vld [vmem:[%s3 + $0x70] sm:$0xff]
      %v275 = vld [vmem:[%s3 + $0x78] sm:$0xff]
      %v276 = vld [vmem:[%s3 + $0x80] sm:$0xff]
      %v277 = vld [vmem:[%s3 + $0x88] sm:$0xff]
      %v278 = vld [vmem:[%s3 + $0x90] sm:$0xff]
      %v279 = vld [vmem:[%s3 + $0x98] sm:$0xff]
      %v280 = vld [vmem:[%s3 + $0xa0] sm:$0xff]
      %v281 = vld [vmem:[%s3 + $0xa8] sm:$0xff]
      %v282 = vld [vmem:[%s3 + $0xb0] sm:$0xff]
      %v283 = vld [vmem:[%s3 + $0xb8] sm:$0xff]
      %v284 = vld [vmem:[%s3 + $0xc0] sm:$0xff]
      %v285 = vld [vmem:[%s3 + $0xc8] sm:$0xff]
      %v286 = vld [vmem:[%s3 + $0xd0] sm:$0xff]
      %v287 = vld [vmem:[%s3 + $0xd8] sm:$0xff]
      %v288 = vld [vmem:[%s3 + $0xe0] sm:$0xff]
      %v289 = vld [vmem:[%s3 + $0xe8] sm:$0xff]
      %v290 = vld [vmem:[%s3 + $0xf0] sm:$0xff]
      %v291 = vld [vmem:[%s3 + $0xf8] sm:$0xff]
      %v292 = vld [vmem:[%s3 + $0x100] sm:$0xff]
      %v293 = vld [vmem:[%s3 + $0x108] sm:$0xff]
      %v294 = vld [vmem:[%s3 + $0x110] sm:$0xff]
      %v295 = vld [vmem:[%s3 + $0x118] sm:$0xff]
      %v296 = vld [vmem:[%s3 + $0x120] sm:$0xff]
      %v297 = vld [vmem:[%s3 + $0x128] sm:$0xff]
      %v298 = vld [vmem:[%s3 + $0x130] sm:$0xff]
      %v299 = vld [vmem:[%s3 + $0x138] sm:$0xff]
      %v300 = vld [vmem:[%s3 + $0x140] sm:$0xff]
      %v301 = vld [vmem:[%s3 + $0x148] sm:$0xff]
      %v302 = vld [vmem:[%s3 + $0x150] sm:$0xff]
      %v303 = vld [vmem:[%s3 + $0x158] sm:$0xff]
      %v304 = vld [vmem:[%s3 + $0x160] sm:$0xff]
      %v305 = vld [vmem:[%s3 + $0x168] sm:$0xff]
      %v306 = vld [vmem:[%s3 + $0x170] sm:$0xff]
      %v307 = vld [vmem:[%s3 + $0x178] sm:$0xff]
      %v308 = vld [vmem:[%s3 + $0x180] sm:$0xff]
      %v309 = vld [vmem:[%s3 + $0x188] sm:$0xff]
      %v310 = vld [vmem:[%s3 + $0x190] sm:$0xff]
      %v311 = vld [vmem:[%s3 + $0x198] sm:$0xff]
      %v312 = vld [vmem:[%s3 + $0x1a0] sm:$0xff]
      %v313 = vld [vmem:[%s3 + $0x1a8] sm:$0xff]
      %v314 = vld [vmem:[%s3 + $0x1b0] sm:$0xff]
      %v315 = vld [vmem:[%s3 + $0x1b8] sm:$0xff]
      %v316 = vld [vmem:[%s3 + $0x1c0] sm:$0xff]
      %v317 = vld [vmem:[%s3 + $0x1c8] sm:$0xff]
      %v318 = vld [vmem:[%s3 + $0x1d0] sm:$0xff]
      %v319 = vld [vmem:[%s3 + $0x1d8] sm:$0xff]
      %v320 = vld [vmem:[%s3 + $0x1e0] sm:$0xff]
      %v321 = vld [vmem:[%s3 + $0x1e8] sm:$0xff]
      %v322 = vld [vmem:[%s3 + $0x1f0] sm:$0xff]
      %v323 = vld [vmem:[%s3 + $0x1f8] sm:$0xff]
      %324 = vmatprep.subr.mxu0 %v261
      %325 = vmatpush1.msra.mxu0 %v260
      %326 = vmatprep.subr.mxu0 %v265
      %327 = vmatpush1.msra.mxu0 %v264
      %328 = vmatprep.subr.mxu0 %v269
      %329 = vmatpush1.msra.mxu0 %v268
      %330 = vmatprep.subr.mxu0 %v273
      %331 = vmatpush1.msra.mxu0 %v272
      %332 = vmatprep.subr.mxu0 %v277
      %333 = vmatpush1.msra.mxu0 %v276
      %334 = vmatprep.subr.mxu0 %v281
      %335 = vmatpush1.msra.mxu0 %v280
      %336 = vmatprep.subr.mxu0 %v285
      %337 = vmatpush1.msra.mxu0 %v284
      %338 = vmatprep.subr.mxu0 %v289
      %339 = vmatpush1.msra.mxu0 %v288
      %340 = vmatprep.subr.mxu0 %v293
      %341 = vmatpush1.msra.mxu0 %v292
      %342 = vmatprep.subr.mxu0 %v297
      %343 = vmatpush1.msra.mxu0 %v296
      %344 = vmatprep.subr.mxu0 %v301
      %345 = vmatpush1.msra.mxu0 %v300
      %346 = vmatprep.subr.mxu0 %v305
      %347 = vmatpush1.msra.mxu0 %v304
      %348 = vmatprep.subr.mxu0 %v309
      %349 = vmatpush1.msra.mxu0 %v308
      %350 = vmatprep.subr.mxu0 %v313
      %351 = vmatpush1.msra.mxu0 %v312
      %352 = vmatprep.subr.mxu0 %v317
      %353 = vmatpush1.msra.mxu0 %v316
      %354 = vmatprep.subr.mxu0 %v321
      %355 = vmatpush1.msra.mxu0 %v320
      %356 = vmatprep.subr.mxu0 0.0
      %357 = vmatpush1.msra.mxu0 0.0
      %358 = vmatprep.subr.mxu0 0.0
      %359 = vmatpush1.msra.mxu0 0.0
      %360 = vmatprep.subr.mxu0 0.0
      %361 = vmatpush1.msra.mxu0 0.0
      %362 = vmatprep.subr.mxu0 0.0
      %363 = vmatpush1.msra.mxu0 0.0
      %364 = vmatprep.subr.mxu0 0.0
      %365 = vmatpush1.msra.mxu0 0.0
      %366 = vmatprep.subr.mxu0 0.0
      %367 = vmatpush1.msra.mxu0 0.0
      %368 = vmatprep.subr.mxu0 0.0
      %369 = vmatpush1.msra.mxu0 0.0
      %370 = vmatprep.subr.mxu0 0.0
      %371 = vmatpush1.msra.mxu0 0.0
      %372 = vmatprep.subr.mxu0 0.0
      %373 = vmatpush1.msra.mxu0 0.0
      %374 = vmatprep.subr.mxu0 0.0
      %375 = vmatpush1.msra.mxu0 0.0
      %376 = vmatprep.subr.mxu0 0.0
      %377 = vmatpush1.msra.mxu0 0.0
      %378 = vmatprep.subr.mxu0 0.0
      %379 = vmatpush1.msra.mxu0 0.0
      %380 = vmatprep.subr.mxu0 0.0
      %381 = vmatpush1.msra.mxu0 0.0
      %382 = vmatprep.subr.mxu0 0.0
      %383 = vmatpush1.msra.mxu0 0.0
      %384 = vmatprep.subr.mxu0 0.0
      %385 = vmatpush1.msra.mxu0 0.0
      %386 = vmatprep.subr.mxu0 0.0
      %387 = vmatpush1.msra.mxu0 0.0
      %388 = vmatprep.mubr.f32.mxu0 0.0
      %389 = vmatmul.mubr.f32.gmra.mrb[0].mxu0 %v258
      %v390 = vpop.f32.mrb[0].mxu0
      %v391 = vadd.f32 0.0, %v390
      %v392 = vpop.f32.mrb[0].mxu0
      %v393 = vadd.f32 0.0, %v392
      %394 = vmatprep.mubr.f32.mxu0 0.0
      %395 = vmatmul.mubr.f32.gmra.mrb[0].mxu0 %v259
      %v396 = vpop.f32.mrb[0].mxu0
      %v397 = vadd.f32 0.0, %v396
      %v398 = vpop.f32.mrb[0].mxu0
      %v399 = vadd.f32 0.0, %v398
      %400 = vdwg.mxu0
      %401 = vmatprep.subr.mxu0 %v263
      %402 = vmatpush1.msra.mxu0 %v262
      %403 = vmatprep.subr.mxu0 %v267
      %404 = vmatpush1.msra.mxu0 %v266
      %405 = vmatprep.subr.mxu0 %v271
      %406 = vmatpush1.msra.mxu0 %v270
      %407 = vmatprep.subr.mxu0 %v275
      %408 = vmatpush1.msra.mxu0 %v274
      %409 = vmatprep.subr.mxu0 %v279
      %410 = vmatpush1.msra.mxu0 %v278
      %411 = vmatprep.subr.mxu0 %v283
      %412 = vmatpush1.msra.mxu0 %v282
      %413 = vmatprep.subr.mxu0 %v287
      %414 = vmatpush1.msra.mxu0 %v286
      %415 = vmatprep.subr.mxu0 %v291
      %416 = vmatpush1.msra.mxu0 %v290
      %417 = vmatprep.subr.mxu0 %v295
      %418 = vmatpush1.msra.mxu0 %v294
      %419 = vmatprep.subr.mxu0 %v299
      %420 = vmatpush1.msra.mxu0 %v298
      %421 = vmatprep.subr.mxu0 %v303
      %422 = vmatpush1.msra.mxu0 %v302
      %423 = vmatprep.subr.mxu0 %v307
      %424 = vmatpush1.msra.mxu0 %v306
      %425 = vmatprep.subr.mxu0 %v311
      %426 = vmatpush1.msra.mxu0 %v310
      %427 = vmatprep.subr.mxu0 %v315
      %428 = vmatpush1.msra.mxu0 %v314
      %429 = vmatprep.subr.mxu0 %v319
      %430 = vmatpush1.msra.mxu0 %v318
      %431 = vmatprep.subr.mxu0 %v323
      %432 = vmatpush1.msra.mxu0 %v322
      %433 = vmatprep.subr.mxu0 0.0
      %434 = vmatpush1.msra.mxu0 0.0
      %435 = vmatprep.subr.mxu0 0.0
      %436 = vmatpush1.msra.mxu0 0.0
      %437 = vmatprep.subr.mxu0 0.0
      %438 = vmatpush1.msra.mxu0 0.0
      %439 = vmatprep.subr.mxu0 0.0
      %440 = vmatpush1.msra.mxu0 0.0
      %441 = vmatprep.subr.mxu0 0.0
      %442 = vmatpush1.msra.mxu0 0.0
      %443 = vmatprep.subr.mxu0 0.0
      %444 = vmatpush1.msra.mxu0 0.0
      %445 = vmatprep.subr.mxu0 0.0
      %446 = vmatpush1.msra.mxu0 0.0
      %447 = vmatprep.subr.mxu0 0.0
      %448 = vmatpush1.msra.mxu0 0.0
      %449 = vmatprep.subr.mxu0 0.0
      %450 = vmatpush1.msra.mxu0 0.0
      %451 = vmatprep.subr.mxu0 0.0
      %452 = vmatpush1.msra.mxu0 0.0
      %453 = vmatprep.subr.mxu0 0.0
      %454 = vmatpush1.msra.mxu0 0.0
      %455 = vmatprep.subr.mxu0 0.0
      %456 = vmatpush1.msra.mxu0 0.0
      %457 = vmatprep.subr.mxu0 0.0
      %458 = vmatpush1.msra.mxu0 0.0
      %459 = vmatprep.subr.mxu0 0.0
      %460 = vmatpush1.msra.mxu0 0.0
      %461 = vmatprep.subr.mxu0 0.0
      %462 = vmatpush1.msra.mxu0 0.0
      %463 = vmatprep.subr.mxu0 0.0
      %464 = vmatpush1.msra.mxu0 0.0
      %465 = vmatprep.mubr.f32.mxu0 0.0
      %466 = vmatmul.mubr.f32.gmra.mrb[0].mxu0 %v258
      %v467 = vpop.f32.mrb[0].mxu0
      %v468 = vadd.f32 0.0, %v467
      %v469 = vpop.f32.mrb[0].mxu0
      %v470 = vadd.f32 0.0, %v469
      %471 = vmatprep.mubr.f32.mxu0 0.0
      %472 = vmatmul.mubr.f32.gmra.mrb[0].mxu0 %v259
      %v473 = vpop.f32.mrb[0].mxu0
      %v474 = vadd.f32 0.0, %v473
      %v475 = vpop.f32.mrb[0].mxu0
      %v476 = vadd.f32 0.0, %v475
      %477 = vdwg.mxu0
      %478 = vst [vmem:[%s232] sm:$0xff] %v391
      %479 = vst [vmem:[%s232 + $0x8] sm:$0xff] %v393
      %480 = vst [vmem:[%s232 + $0x10] sm:$0xff] %v468
      %481 = vst [vmem:[%s232 + $0x18] sm:$0xff] %v470
      %482 = vst [vmem:[%s232 + $0x20] sm:$0xff] %v397
      %483 = vst [vmem:[%s232 + $0x28] sm:$0xff] %v399
      %484 = vst [vmem:[%s232 + $0x30] sm:$0xff] %v474
      %485 = vst [vmem:[%s232 + $0x38] sm:$0xff] %v476
      %v486 = vadd.f32 %v391, %v397
      %v487 = vrot.slane %v486, 4
      %v488 = vadd.f32 %v486, %v487
      %v489 = vrot.slane %v488, 2
      %v490 = vadd.f32 %v488, %v489
      %v491 = vrot.slane %v490, 1
      %v492 = vadd.f32 %v490, %v491
      %v493 = vadd.f32 %v393, %v399
      %v494 = vrot.slane %v493, 4
      %v495 = vadd.f32 %v493, %v494
      %v496 = vrot.slane %v495, 2
      %v497 = vadd.f32 %v495, %v496
      %v498 = vrot.slane %v497, 1
      %v499 = vadd.f32 %v497, %v498
      %v500 = vadd.f32 %v468, %v474
      %v501 = vrot.slane %v500, 4
      %v502 = vadd.f32 %v500, %v501
      %v503 = vrot.slane %v502, 2
      %v504 = vadd.f32 %v502, %v503
      %v505 = vrot.slane %v504, 1
      %v506 = vadd.f32 %v504, %v505
      %v507 = vadd.f32 %v470, %v476
      %v508 = vrot.slane %v507, 4
      %v509 = vadd.f32 %v507, %v508
      %v510 = vrot.slane %v509, 2
      %v511 = vadd.f32 %v509, %v510
      %v512 = vrot.slane %v511, 1
      %v513 = vadd.f32 %v511, %v512
      %v514 = vmul.f32 %v391, %v391
      %v515 = vmul.f32 %v393, %v393
      %v516 = vmul.f32 %v468, %v468
      %v517 = vmul.f32 %v470, %v470
      %v518 = vmul.f32 %v397, %v397
      %v519 = vmul.f32 %v399, %v399
      %v520 = vmul.f32 %v474, %v474
      %v521 = vmul.f32 %v476, %v476
      %v522 = vadd.f32 %v514, %v518
      %v523 = vrot.slane %v522, 4
      %v524 = vadd.f32 %v522, %v523
      %v525 = vrot.slane %v524, 2
      %v526 = vadd.f32 %v524, %v525
      %v527 = vrot.slane %v526, 1
      %v528 = vadd.f32 %v526, %v527
      %v529 = vadd.f32 %v515, %v519
      %v530 = vrot.slane %v529, 4
      %v531 = vadd.f32 %v529, %v530
      %v532 = vrot.slane %v531, 2
      %v533 = vadd.f32 %v531, %v532
      %v534 = vrot.slane %v533, 1
      %v535 = vadd.f32 %v533, %v534
      %v536 = vadd.f32 %v516, %v520
      %v537 = vrot.slane %v536, 4
      %v538 = vadd.f32 %v536, %v537
      %v539 = vrot.slane %v538, 2
      %v540 = vadd.f32 %v538, %v539
      %v541 = vrot.slane %v540, 1
      %v542 = vadd.f32 %v540, %v541
      %v543 = vadd.f32 %v517, %v521
      %v544 = vrot.slane %v543, 4
      %v545 = vadd.f32 %v543, %v544
      %v546 = vrot.slane %v545, 2
      %v547 = vadd.f32 %v545, %v546
      %v548 = vrot.slane %v547, 1
      %v549 = vadd.f32 %v547, %v548
      %vm550 = vcmask 1040384
      %v551 = vsel %vm550, %v492, %v528
      %v552 = vsel %vm550, %v499, %v535
      %v553 = vsel %vm550, %v506, %v542
      %v554 = vsel %vm550, %v513, %v549
      %v559 = vcombine.low %v551, %v552
      %v560 = vcombine.low %v553, %v554
      %v562 = vunpack.c.l.s4 1983009808
      %v563 = vunpack.c.0.s8 %v562
      %v564 = vlaneseq
      %v565 = vshrl.u32 %v564, 7
      %v566 = vsub.s32 %v563, %v565
      %v567 = vrot.slane %v559, %v566
      %v569 = vunpack.c.l.s4 1983009808
      %v570 = vunpack.c.0.s8 %v569
      %v571 = vlaneseq
      %v572 = vshrl.u32 %v571, 7
      %v573 = vsub.s32 %v570, %v572
      %v574 = vrot.slane %v560, %v573
      %v575 = vcombine.low %v567, %v574
      %577 = vst [vmem:[%s237] sm:$0xff] %v575
      %p578 = scmp.lt.s32.totalorder %s17, 1
      %s579 = scalar_select %p578, %s17, 1
      %s580 = smul.addr %s579, 8
      %s581 = smul.addr %s580, 8
      %s582 = scalar_lea.vmem %s4, %s581
      %p583 = scmp.lt.s32.totalorder %s17, 1
      %s584 = scalar_select %p583, %s17, 1
      %s585 = smul.addr %s584, 4
      %s586 = smul.addr %s585, 2
      %s587 = scalar_lea.vmem %s5, %s586
      // Predicated region
      $region37: #{bottleneck_forward.6} parent=35 // pred_check
        %p588 = pneg %p124
      $region38: #{bottleneck_forward.6} parent=35 // pred_check_branch
        %590 = sbr.rel (%p588) target = $region40
      $region39: #{bottleneck_forward.6} parent=35 // pred_region
        _
      $region40: #{bottleneck_forward.6} parent=35 // pred_fallthru
        _
      // Predicated region
      $region41: #{bottleneck_forward.6} parent=35 // pred_check
        %p591 = pneg %p150
      $region42: #{bottleneck_forward.6} parent=35 // pred_check_branch
        %593 = sbr.rel (%p591) target = $region44
      $region43: #{bottleneck_forward.6} parent=35 // pred_region
        _
      $region44: #{bottleneck_forward.6} parent=35 // pred_fallthru
        _
    $region36: #{bottleneck_forward.6} parent=5 // pred_fallthru
      _
    %p594 = scmp.le.s32.totalorder 2, %s12
    // Predicated region
    $region45: #{bottleneck_forward.6} parent=5 // pred_check
      %p595 = pneg %p594
    $region46: #{bottleneck_forward.6} parent=5 // pred_check_branch
      %597 = sbr.rel (%p595) target = $region48
    $region47: #{bottleneck_forward.6} parent=5 // pred_region
      %s598 = ssub.s32 %s12, 2
      // Predicated region
      $region49: #{bottleneck_forward.6} parent=47 // pred_check
        %p599 = pneg %p130
      $region50: #{bottleneck_forward.6} parent=47 // pred_check_branch
        %601 = sbr.rel (%p599) target = $region52
      $region51: #{bottleneck_forward.6} parent=47 // pred_region
        %p602 = scmp.lt.s32.totalorder %s18, 1
        %s603 = scalar_select %p602, %s18, 1
        %s604 = smul.addr %s603, 8
        %s605 = smul.addr %s604, 8
        %s606 = scalar_lea.vmem %s4, %s605
      $region52: #{bottleneck_forward.6} parent=47 // pred_fallthru
        _
      // Predicated region
      $region53: #{bottleneck_forward.6} parent=47 // pred_check
        %p607 = pneg %p156
      $region54: #{bottleneck_forward.6} parent=47 // pred_check_branch
        %609 = sbr.rel (%p607) target = $region56
      $region55: #{bottleneck_forward.6} parent=47 // pred_region
        %p610 = scmp.lt.s32.totalorder %s18, 1
        %s611 = scalar_select %p610, %s18, 1
        %s612 = smul.addr %s611, 4
        %s613 = smul.addr %s612, 2
        %s614 = scalar_lea.vmem %s5, %s613
      $region56: #{bottleneck_forward.6} parent=47 // pred_fallthru
        _
    $region48: #{bottleneck_forward.6} parent=5 // pred_fallthru
      _
  $region6: #{bottleneck_forward.6} parent=0 // loop_footer
    %s16 = sadd.s32 1, %s12
  $region7: #{bottleneck_forward.6} parent=0 // loop_footer_branch
    %11 = sbr.rel target = $region3
  $region8: #{bottleneck_forward.6} parent=0 // loop_exit
    _

// kernel: tile.53
$region0: #{tile.53}
  #allocation0 [shape = 's32[1]{0}', space=sflag, size = 0x4, scoped, tag = 'scoped memory for tile.53']
  %s0 = inlined_call_operand.vmem [shape: f32[32], index: 0, kind: input, shape index: {}]
  %s1 = inlined_call_operand.vmem [shape: f32[16,32], index: 1, kind: output, shape index: {}]
  // Predicated region
  $region2: #{tile.53} parent=0 // pred_check
    _
  $region3: #{tile.53} parent=0 // pred_check_branch
    %3 = sbr.rel (0) target = $region5
  $region4: #{tile.53} parent=0 // pred_region
    _
  $region5: #{tile.53} parent=0 // pred_fallthru
    _
  %v4 = vld [vmem:[%s0] ss:$0 sm:$0xff]
  %5 = vst [vmem:[%s1] sm:$0xff] %v4
  %s6 = scalar_lea.vmem %s1, 8
  %7 = vst [vmem:[%s6] sm:$0xff] %v4

// kernel: tile.54
$region0: #{tile.54}
  %s0 = inlined_call_operand.vmem [shape: f32[16,32], index: 0, kind: input, shape index: {}]
  %s1 = inlined_call_operand.vmem [shape: f32[1,512], index: 1, kind: output, shape index: {}]
  $region1: #{tile.54} parent=0
    #allocation0 [shape = 'u8[16384]{0}', space=vmem, size = 0x4000, scoped, tag = 'scoped mem for output reshape']
    %v2 = vld [vmem:[%s0] ss:$4 sm:$0xf]
    %vm3 = vcmask 261120
    %4 = vst.msk [vmem:[#allocation0] ss:$8 sm:$0xf] %vm3, %v2
    %s5 = scalar_lea.vmem %s0, 3
    %v6 = vld [vmem:[%s5] ss:$4 sm:$0xf]
    %7 = vrot.lane.b32.xlu0 %v6, 96
    %v8 = vpop.permute.xlu0 %7
    %vm9 = vcmask 1048320
    %10 = vst.msk [vmem:[#allocation0] ss:$8 sm:$0xf] %vm9, %v8
    %s11 = scalar_lea.vmem %s0, 2
    %v12 = vld [vmem:[%s11] ss:$4 sm:$0xf]
    %13 = vrot.lane.b32.xlu0 %v12, 64
    %v14 = vpop.permute.xlu0 %13
    %vm15 = vcmask 785920
    %16 = vst.msk [vmem:[#allocation0] ss:$8 sm:$0xf] %vm15, %v14
    %s17 = scalar_lea.vmem %s0, 1
    %v18 = vld [vmem:[%s17] ss:$4 sm:$0xf]
    %19 = vrot.lane.b32.xlu0 %v18, 32
    %v20 = vpop.permute.xlu0 %19
    %vm21 = vcmask 523520
    %22 = vst.msk [vmem:[#allocation0] ss:$8 sm:$0xf] %vm21, %v20
    %s24 = sshllo.u32 0, 1
    %v26 = vld [vmem:[#allocation0] sm:%s24]
    %s27 = sshllo.u32 0, 1
    %28 = vst [vmem:[%s1] sm:%s27] %v26
    %s29 = scalar_lea.vmem [#allocation0], 8
    %v30 = vld [vmem:[%s29] sm:%s24]
    %s31 = sshllo.u32 0, 1
    %s32 = scalar_lea.vmem %s1, 1
    %33 = vst [vmem:[%s32] sm:%s31] %v30
    %s34 = scalar_lea.vmem [#allocation0], 16
    %v35 = vld [vmem:[%s34] sm:%s24]
    %s36 = sshllo.u32 0, 1
    %s37 = smul.addr 1, 2
    %s38 = scalar_lea.vmem %s1, %s37
    %39 = vst [vmem:[%s38] sm:%s36] %v35
    %s40 = scalar_lea.vmem [#allocation0], 24
    %v41 = vld [vmem:[%s40] sm:%s24]
    %s42 = sshllo.u32 0, 1
    %s43 = smul.addr 1, 3
    %s44 = scalar_lea.vmem %s1, %s43
    %45 = vst [vmem:[%s44] sm:%s42] %v41

// kernel: bottleneck_forward.7
$region0: #{bottleneck_forward.7}
  #allocation0 [shape = 'u32[]', space=smem, size = 0x4, offset = 0x4, fixed_abs, tag = 'smem constant byte address 0x4 - core index']
  #allocation1 [shape = 'u32[144,128]{1,0:T(1,128)}', space=vmem, size = 0x12000, scoped, tag = 'internal scratch']
  %s0 = inlined_call_operand.vmem [shape: f32[2,16,512], index: 0, kind: input, shape index: {}]
  %s1 = inlined_call_operand.vmem [shape: f32[1,512], index: 1, kind: input, shape index: {}]
  %s2 = inlined_call_operand.vmem [shape: f32[1,512], index: 2, kind: input, shape index: {}]
  %s3 = inlined_call_operand.vmem [shape: f32[2,16,512], index: 3, kind: input, shape index: {}]
  %s4 = inlined_call_operand.vmem [shape: f32[2,16,512], index: 4, kind: output, shape index: {}]
  %s5 = sld [smem:[#allocation0]]
  $region49: #{bottleneck_forward.7} parent=0
    _
  %s7 = ssub.s32 1, %s5
  %s8 = scalar_select 0, %s7, %s5
  loop: start=0, step=1, limit=4
  $region2: #{bottleneck_forward.7} parent=0 // loop_pre_header
    _
  $region3: #{bottleneck_forward.7} parent=0 // loop_header
    %s10 = sphi 0, %s14
    %p11 = scmp.ge.s32.totalorder %s10, 4
    %s20 = sphi 0, %s22
    %s23 = sphi 0, %s20
    %s24 = sphi 0, %s23
    %s40 = sphi 0, %s24
    %s44 = sphi 0, %s44
    %s46 = sphi 0, %s44
    %s47 = sphi 0, %s46
    %s61 = sphi 0, %s47
    %s65 = sphi 0, %s65
    %s67 = sphi 0, %s65
    %s68 = sphi 0, %s67
    %s82 = sphi 0, %s68
    %s88 = sphi 0, %s90
    %s91 = sphi 0, %s88
    %s92 = sphi 0, %s91
    %s108 = sphi 0, %s92
    %s114 = sphi 0, %s116
    %s117 = sphi 0, %s114
    %s118 = sphi 0, %s117
    %s134 = sphi 0, %s118
  $region4: #{bottleneck_forward.7} parent=0 // loop_header_branch
    %13 = sbr.rel (%p11) target = $region8
  $region5: #{bottleneck_forward.7} parent=0 // loop_body
    %s15 = ssub.s32 %s10, 1
    %s16 = ssub.s32 %s10, 2
    %s17 = sadd.s32 %s10, 1
    %s18 = ssub.s32 %s10, %s17
    %p19 = scmp.eq.s32.totalorder %s18, 0
    %s21 = sadd.s32 %s20, 1
    %s22 = scalar_select %p19, %s20, %s21
    %p25 = pneg %p19
    %p26 = scmp.eq.s32.totalorder %s10, 1
    %p27 = por %p25, %p26
    %p28 = scmp.ne.s32.totalorder %s20, %s23
    %p29 = scmp.eq.s32.totalorder %s10, 0
    %p30 = por %p28, %p29
    %p31 = scmp.ne.s32.totalorder %s20, %s23
    %p32 = scmp.eq.s32.totalorder %s15, 1
    %p33 = por %p31, %p32
    %p34 = scmp.ne.s32.totalorder %s23, %s24
    %p35 = scmp.eq.s32.totalorder %s15, 0
    %p36 = por %p34, %p35
    %p37 = scmp.ne.s32.totalorder %s23, %s24
    %p38 = scmp.eq.s32.totalorder %s16, 1
    %p39 = por %p37, %p38
    %p41 = scmp.ne.s32.totalorder %s24, %s40
    %p42 = scmp.eq.s32.totalorder %s16, 0
    %p43 = por %p41, %p42
    %s45 = sadd.s32 %s44, 1
    %p48 = scmp.eq.s32.totalorder %s10, 1
    %p49 = scmp.ne.s32.totalorder %s44, %s46
    %p50 = scmp.eq.s32.totalorder %s10, 0
    %p51 = por %p49, %p50
    %p52 = scmp.ne.s32.totalorder %s44, %s46
    %p53 = scmp.eq.s32.totalorder %s15, 1
    %p54 = por %p52, %p53
    %p55 = scmp.ne.s32.totalorder %s46, %s47
    %p56 = scmp.eq.s32.totalorder %s15, 0
    %p57 = por %p55, %p56
    %p58 = scmp.ne.s32.totalorder %s46, %s47
    %p59 = scmp.eq.s32.totalorder %s16, 1
    %p60 = por %p58, %p59
    %p62 = scmp.ne.s32.totalorder %s47, %s61
    %p63 = scmp.eq.s32.totalorder %s16, 0
    %p64 = por %p62, %p63
    %s66 = sadd.s32 %s65, 1
    %p69 = scmp.eq.s32.totalorder %s10, 1
    %p70 = scmp.ne.s32.totalorder %s65, %s67
    %p71 = scmp.eq.s32.totalorder %s10, 0
    %p72 = por %p70, %p71
    %p73 = scmp.ne.s32.totalorder %s65, %s67
    %p74 = scmp.eq.s32.totalorder %s15, 1
    %p75 = por %p73, %p74
    %p76 = scmp.ne.s32.totalorder %s67, %s68
    %p77 = scmp.eq.s32.totalorder %s15, 0
    %p78 = por %p76, %p77
    %p79 = scmp.ne.s32.totalorder %s67, %s68
    %p80 = scmp.eq.s32.totalorder %s16, 1
    %p81 = por %p79, %p80
    %p83 = scmp.ne.s32.totalorder %s68, %s82
    %p84 = scmp.eq.s32.totalorder %s16, 0
    %p85 = por %p83, %p84
    %s86 = ssub.s32 %s10, %s17
    %p87 = scmp.eq.s32.totalorder %s86, 0
    %s89 = sadd.s32 %s88, 1
    %s90 = scalar_select %p87, %s88, %s89
    %p93 = pneg %p87
    %p94 = scmp.eq.s32.totalorder %s10, 1
    %p95 = por %p93, %p94
    %p96 = scmp.ne.s32.totalorder %s88, %s91
    %p97 = scmp.eq.s32.totalorder %s10, 0
    %p98 = por %p96, %p97
    %p99 = scmp.ne.s32.totalorder %s88, %s91
    %p100 = scmp.eq.s32.totalorder %s15, 1
    %p101 = por %p99, %p100
    %p102 = scmp.ne.s32.totalorder %s91, %s92
    %p103 = scmp.eq.s32.totalorder %s15, 0
    %p104 = por %p102, %p103
    %p105 = scmp.ne.s32.totalorder %s91, %s92
    %p106 = scmp.eq.s32.totalorder %s16, 1
    %p107 = por %p105, %p106
    %p109 = scmp.ne.s32.totalorder %s92, %s108
    %p110 = scmp.eq.s32.totalorder %s16, 0
    %p111 = por %p109, %p110
    %s112 = ssub.s32 %s10, %s17
    %p113 = scmp.eq.s32.totalorder %s112, 0
    %s115 = sadd.s32 %s114, 1
    %s116 = scalar_select %p113, %s114, %s115
    %p119 = pneg %p113
    %p120 = scmp.eq.s32.totalorder %s10, 1
    %p121 = por %p119, %p120
    %p122 = scmp.ne.s32.totalorder %s114, %s117
    %p123 = scmp.eq.s32.totalorder %s10, 0
    %p124 = por %p122, %p123
    %p125 = scmp.ne.s32.totalorder %s114, %s117
    %p126 = scmp.eq.s32.totalorder %s15, 1
    %p127 = por %p125, %p126
    %p128 = scmp.ne.s32.totalorder %s117, %s118
    %p129 = scmp.eq.s32.totalorder %s15, 0
    %p130 = por %p128, %p129
    %p131 = scmp.ne.s32.totalorder %s117, %s118
    %p132 = scmp.eq.s32.totalorder %s16, 1
    %p133 = por %p131, %p132
    %p135 = scmp.ne.s32.totalorder %s118, %s134
    %p136 = scmp.eq.s32.totalorder %s16, 0
    %p137 = por %p135, %p136
    %p138 = scmp.le.s32.totalorder 1, %s10
    %p139 = scmp.lt.s32.totalorder %s10, 3
    %p140 = pnand %p138, %p139
    %p141 = pneg %p140
    // Predicated region
    $region9: #{bottleneck_forward.7} parent=5 // pred_check
      _
    $region10: #{bottleneck_forward.7} parent=5 // pred_check_branch
      %143 = sbr.rel (%p140) target = $region12
    $region11: #{bottleneck_forward.7} parent=5 // pred_region
      %s144 = ssub.s32 %s10, 1
      // Predicated region
      $region13: #{bottleneck_forward.7} parent=11 // pred_check
        %p145 = pneg %p57
      $region14: #{bottleneck_forward.7} parent=11 // pred_check_branch
        %147 = sbr.rel (%p145) target = $region16
      $region15: #{bottleneck_forward.7} parent=11 // pred_region
        _
      $region16: #{bottleneck_forward.7} parent=11 // pred_fallthru
        _
      // Predicated region
      $region17: #{bottleneck_forward.7} parent=11 // pred_check
        %p148 = pneg %p78
      $region18: #{bottleneck_forward.7} parent=11 // pred_check_branch
        %150 = sbr.rel (%p148) target = $region20
      $region19: #{bottleneck_forward.7} parent=11 // pred_region
        _
      $region20: #{bottleneck_forward.7} parent=11 // pred_fallthru
        _
    $region12: #{bottleneck_forward.7} parent=5 // pred_fallthru
      _
    %p151 = scmp.lt.s32.totalorder %s10, 2
    // Predicated region
    $region21: #{bottleneck_forward.7} parent=5 // pred_check
      %p152 = pneg %p151
    $region22: #{bottleneck_forward.7} parent=5 // pred_check_branch
      %154 = sbr.rel (%p152) target = $region24
    $region23: #{bottleneck_forward.7} parent=5 // pred_region
      // Predicated region
      $region25: #{bottleneck_forward.7} parent=23 // pred_check
        %p155 = pneg %p30
      $region26: #{bottleneck_forward.7} parent=23 // pred_check_branch
        %157 = sbr.rel (%p155) target = $region28
      $region27: #{bottleneck_forward.7} parent=23 // pred_region
        %p158 = scmp.lt.s32.totalorder %s10, 1
        %s159 = scalar_select %p158, %s10, 1
        %s160 = smul.addr %s159, 8
        %s161 = smul.addr %s160, 8
        %s162 = scalar_lea.vmem %s0, %s161
      $region28: #{bottleneck_forward.7} parent=23 // pred_fallthru
        _
      // Predicated region
      $region29: #{bottleneck_forward.7} parent=23 // pred_check
        %p163 = pneg %p98
      $region30: #{bottleneck_forward.7} parent=23 // pred_check_branch
        %165 = sbr.rel (%p163) target = $region32
      $region31: #{bottleneck_forward.7} parent=23 // pred_region
        %p166 = scmp.lt.s32.totalorder %s10, 1
        %s167 = scalar_select %p166, %s10, 1
        %s168 = smul.addr %s167, 8
        %s169 = smul.addr %s168, 8
        %s170 = scalar_lea.vmem %s3, %s169
      $region32: #{bottleneck_forward.7} parent=23 // pred_fallthru
        _
    $region24: #{bottleneck_forward.7} parent=5 // pred_fallthru
      _
    %p171 = scmp.le.s32.totalorder 1, %s10
    %p172 = scmp.lt.s32.totalorder %s10, 3
    %p173 = pnand %p171, %p172
    %p174 = pneg %p173
    // Predicated region
    $region33: #{bottleneck_forward.7} parent=5 // pred_check
      _
    $region34: #{bottleneck_forward.7} parent=5 // pred_check_branch
      %176 = sbr.rel (%p173) target = $region36
    $region35: #{bottleneck_forward.7} parent=5 // pred_region
      %s177 = ssub.s32 %s10, 1
      %p178 = scmp.lt.s32.totalorder %s15, 1
      %s179 = scalar_select %p178, %s15, 1
      %s180 = smul.addr %s179, 8
      %s181 = smul.addr %s180, 8
      %s182 = scalar_lea.vmem %s0, %s181
      %p183 = pneg %p36
      %p184 = pneg %p33
      %p185 = pneg %p57
      %p186 = pneg %p54
      %p187 = pneg %p78
      %p188 = pneg %p75
      %p189 = scmp.lt.s32.totalorder %s15, 1
      %s190 = scalar_select %p189, %s15, 1
      %s191 = smul.addr %s190, 8
      %s192 = smul.addr %s191, 8
      %s193 = scalar_lea.vmem %s3, %s192
      %p194 = pneg %p104
      %p195 = pneg %p101
      %p196 = pneg %p130
      %p197 = pneg %p127
      %p198 = scmp.lt.s32.totalorder %s15, 1
      %s199 = scalar_select %p198, %s15, 1
      %s200 = smul.addr %s199, 8
      %s201 = smul.addr %s200, 8
      %s202 = scalar_lea.vmem %s4, %s201
      %p203 = scmp.lt.s32.totalorder %s15, 1
      %s204 = scalar_select %p203, %s15, 1
      %s205 = smul.addr %s204, 8
      %s206 = smul.addr %s205, 8
      %s207 = scalar_lea.vmem %s0, %s206
      %p208 = scmp.lt.s32.totalorder %s15, 1
      %s209 = scalar_select %p208, %s15, 1
      %s210 = smul.addr %s209, 8
      %s211 = smul.addr %s210, 8
      %s212 = scalar_lea.vmem %s3, %s211
      %p213 = scmp.lt.s32.totalorder %s15, 1
      %s214 = scalar_select %p213, %s15, 1
      %s215 = smul.addr %s214, 8
      %s216 = smul.addr %s215, 8
      %s217 = scalar_lea.vmem %s4, %s216
      %v218 = vld [vmem:[%s207] sm:$0xff]
      %v219 = vld [vmem:[%s207 + $0x8] sm:$0xff]
      %v220 = vld [vmem:[%s207 + $0x10] sm:$0xff]
      %v221 = vld [vmem:[%s207 + $0x18] sm:$0xff]
      %v222 = vld [vmem:[%s207 + $0x20] sm:$0xff]
      %v223 = vld [vmem:[%s207 + $0x28] sm:$0xff]
      %v224 = vld [vmem:[%s207 + $0x30] sm:$0xff]
      %v225 = vld [vmem:[%s207 + $0x38] sm:$0xff]
      %v226 = vld [vmem:[%s1] sm:$0xf]
      %v228 = vlaneseq
      %v229 = vshrl.u32 %v228, 7
      %v230 = vsub.s32 0, %v229
      %v231 = vrot.slane %v226, %v230
      %v232 = vlaneseq
      %v233 = vshrl.u32 %v232, 7
      %v234 = vsub.s32 1, %v233
      %v235 = vrot.slane %v226, %v234
      %v236 = vlaneseq
      %v237 = vshrl.u32 %v236, 7
      %v238 = vsub.s32 2, %v237
      %v239 = vrot.slane %v226, %v238
      %v240 = vlaneseq
      %v241 = vshrl.u32 %v240, 7
      %v242 = vsub.s32 3, %v241
      %v243 = vrot.slane %v226, %v242
      %v248 = vmul.f32 %v218, %v231
      %v249 = vmul.f32 %v219, %v235
      %v250 = vmul.f32 %v220, %v239
      %v251 = vmul.f32 %v221, %v243
      %v252 = vmul.f32 %v222, %v231
      %v253 = vmul.f32 %v223, %v235
      %v254 = vmul.f32 %v224, %v239
      %v255 = vmul.f32 %v225, %v243
      %v256 = vld [vmem:[%s2] sm:$0xf]
      %v258 = vlaneseq
      %v259 = vshrl.u32 %v258, 7
      %v260 = vsub.s32 0, %v259
      %v261 = vrot.slane %v256, %v260
      %v262 = vlaneseq
      %v263 = vshrl.u32 %v262, 7
      %v264 = vsub.s32 1, %v263
      %v265 = vrot.slane %v256, %v264
      %v266 = vlaneseq
      %v267 = vshrl.u32 %v266, 7
      %v268 = vsub.s32 2, %v267
      %v269 = vrot.slane %v256, %v268
      %v270 = vlaneseq
      %v271 = vshrl.u32 %v270, 7
      %v272 = vsub.s32 3, %v271
      %v273 = vrot.slane %v256, %v272
      %v278 = vadd.f32 %v248, %v261
      %v279 = vadd.f32 %v249, %v265
      %v280 = vadd.f32 %v250, %v269
      %v281 = vadd.f32 %v251, %v273
      %v282 = vadd.f32 %v252, %v261
      %v283 = vadd.f32 %v253, %v265
      %v284 = vadd.f32 %v254, %v269
      %v285 = vadd.f32 %v255, %v273
      %v286 = vld [vmem:[%s212] sm:$0xff]
      %v287 = vld [vmem:[%s212 + $0x8] sm:$0xff]
      %v288 = vld [vmem:[%s212 + $0x10] sm:$0xff]
      %v289 = vld [vmem:[%s212 + $0x18] sm:$0xff]
      %v290 = vld [vmem:[%s212 + $0x20] sm:$0xff]
      %v291 = vld [vmem:[%s212 + $0x28] sm:$0xff]
      %v292 = vld [vmem:[%s212 + $0x30] sm:$0xff]
      %v293 = vld [vmem:[%s212 + $0x38] sm:$0xff]
      %v294 = vadd.f32 %v278, %v286
      %v295 = vadd.f32 %v279, %v287
      %v296 = vadd.f32 %v280, %v288
      %v297 = vadd.f32 %v281, %v289
      %v298 = vadd.f32 %v282, %v290
      %v299 = vadd.f32 %v283, %v291
      %v300 = vadd.f32 %v284, %v292
      %v301 = vadd.f32 %v285, %v293
      %v302 = vmax.f32 %v294, 0.0
      %v303 = vmax.f32 %v295, 0.0
      %v304 = vmax.f32 %v296, 0.0
      %v305 = vmax.f32 %v297, 0.0
      %v306 = vmax.f32 %v298, 0.0
      %v307 = vmax.f32 %v299, 0.0
      %v308 = vmax.f32 %v300, 0.0
      %v309 = vmax.f32 %v301, 0.0
      %310 = vst [vmem:[%s217] sm:$0xff] %v302
      %311 = vst [vmem:[%s217 + $0x8] sm:$0xff] %v303
      %312 = vst [vmem:[%s217 + $0x10] sm:$0xff] %v304
      %313 = vst [vmem:[%s217 + $0x18] sm:$0xff] %v305
      %314 = vst [vmem:[%s217 + $0x20] sm:$0xff] %v306
      %315 = vst [vmem:[%s217 + $0x28] sm:$0xff] %v307
      %316 = vst [vmem:[%s217 + $0x30] sm:$0xff] %v308
      %317 = vst [vmem:[%s217 + $0x38] sm:$0xff] %v309
      %p318 = scmp.lt.s32.totalorder %s15, 1
      %s319 = scalar_select %p318, %s15, 1
      %s320 = smul.addr %s319, 8
      %s321 = smul.addr %s320, 8
      %s322 = scalar_lea.vmem %s4, %s321
      // Predicated region
      $region37: #{bottleneck_forward.7} parent=35 // pred_check
        %p323 = pneg %p127
      $region38: #{bottleneck_forward.7} parent=35 // pred_check_branch
        %325 = sbr.rel (%p323) target = $region40
      $region39: #{bottleneck_forward.7} parent=35 // pred_region
        _
      $region40: #{bottleneck_forward.7} parent=35 // pred_fallthru
        _
    $region36: #{bottleneck_forward.7} parent=5 // pred_fallthru
      _
    %p326 = scmp.le.s32.totalorder 2, %s10
    // Predicated region
    $region41: #{bottleneck_forward.7} parent=5 // pred_check
      %p327 = pneg %p326
    $region42: #{bottleneck_forward.7} parent=5 // pred_check_branch
      %329 = sbr.rel (%p327) target = $region44
    $region43: #{bottleneck_forward.7} parent=5 // pred_region
      %s330 = ssub.s32 %s10, 2
      // Predicated region
      $region45: #{bottleneck_forward.7} parent=43 // pred_check
        %p331 = pneg %p133
      $region46: #{bottleneck_forward.7} parent=43 // pred_check_branch
        %333 = sbr.rel (%p331) target = $region48
      $region47: #{bottleneck_forward.7} parent=43 // pred_region
        %p334 = scmp.lt.s32.totalorder %s16, 1
        %s335 = scalar_select %p334, %s16, 1
        %s336 = smul.addr %s335, 8
        %s337 = smul.addr %s336, 8
        %s338 = scalar_lea.vmem %s4, %s337
      $region48: #{bottleneck_forward.7} parent=43 // pred_fallthru
        _
    $region44: #{bottleneck_forward.7} parent=5 // pred_fallthru
      _
  $region6: #{bottleneck_forward.7} parent=0 // loop_footer
    %s14 = sadd.s32 1, %s10
  $region7: #{bottleneck_forward.7} parent=0 // loop_footer_branch
    %9 = sbr.rel target = $region3
  $region8: #{bottleneck_forward.7} parent=0 // loop_exit
    _

</llo_original>
